<compile_context>
chip_gen: v5e
topology: v5e:2x2
jax: 0.10.0
libtpu: 0.0.40
codegen_flags: <defaults>
</compile_context>

<pallas_src>
import functools

import jax
import jax.numpy as jnp
from jax.experimental import pallas as pl
from jax.experimental.pallas import tpu as pltpu

LANE = 128        # vreg lane width
TILE_ROWS = 64    # sublane rows per grid step -> 64*128 = 8192 dihedrals / step


def _detect_num_splits():
    """2 on dual-TensorCore chips (v7x), else 1 (v5e / v6e are single-TC)."""
    try:
        kind = jax.devices()[0].device_kind.lower()
    except Exception:
        return 1
    return 2 if ("v7" in kind or "tpu7" in kind) else 1


NUM_SPLITS = _detect_num_splits()


def _dihedral_kernel(geom_ref, bid_ref, out_ref, *, n_degs, n_structures,
                     tiles_per_split, num_tiles, gate):
    """One tile of TILE_ROWS*128 dihedrals; all intermediates dense (TR, 128).

    geom_ref : (13 + 2*n_degs, TR, 128) f32
               rows 0..11                  : p0x p0y p0z p1x ... p3z
               rows 12..12+n_degs-1        : k1_n
               rows 12+n_degs..12+2n_degs-1: k2_n
               row  12+2*n_degs            : v0
    bid_ref  : (TR, 128) int32  structure id per dihedral (== n_structures for
               padded lanes -> never matches a real structure)
    out_ref  : (n_struct_pad, 128) f32 per-split accumulator (structure on
               sublanes; the lane axis is summed wrapper-side)
    """
    @pl.when(pl.program_id(1) == 0)
    def _():
        out_ref[...] = jnp.zeros_like(out_ref)

    def compute():
        row = lambda i: geom_ref[i]          # (TR, 128) slab, loaded on demand

        # bond vectors (compute_torsions convention: b1=p1-p0, b2=p2-p1, b3=p3-p2)
        b1x, b1y, b1z = row(3) - row(0), row(4) - row(1), row(5) - row(2)
        b2x, b2y, b2z = row(6) - row(3), row(7) - row(4), row(8) - row(5)
        b3x, b3y, b3z = row(9) - row(6), row(10) - row(7), row(11) - row(8)

        # n1 = b1 x b2, n2 = b2 x b3
        n1x = b1y * b2z - b1z * b2y
        n1y = b1z * b2x - b1x * b2z
        n1z = b1x * b2y - b1y * b2x
        n2x = b2y * b3z - b2z * b3y
        n2y = b2z * b3x - b2x * b3z
        n2z = b2x * b3y - b2y * b3x

        # Normalize n1, n2, b2: atan2 is scale-invariant so the angle is
        # unchanged, and x*x + y*y can no longer overflow f32.  Guarded rsqrt
        # keeps degenerate (collinear) geometry finite (rsqrt on the EUP slot).
        inv_n1 = jax.lax.rsqrt(jnp.maximum(n1x * n1x + n1y * n1y + n1z * n1z, 1e-30))
        inv_n2 = jax.lax.rsqrt(jnp.maximum(n2x * n2x + n2y * n2y + n2z * n2z, 1e-30))
        inv_b2 = jax.lax.rsqrt(jnp.maximum(b2x * b2x + b2y * b2y + b2z * b2z, 1e-30))
        n1x, n1y, n1z = n1x * inv_n1, n1y * inv_n1, n1z * inv_n1
        n2x, n2y, n2z = n2x * inv_n2, n2y * inv_n2, n2z * inv_n2
        b2x, b2y, b2z = b2x * inv_b2, b2y * inv_b2, b2z * inv_b2

        # x = n1.n2 ; y = (n1 x b2_hat).n2  (accumulated component-by-component
        # to keep live ranges narrow) ; theta = atan2(y, x)
        x = n1x * n2x + n1y * n2y + n1z * n2z
        y = (n1y * b2z - n1z * b2y) * n2x
        y = y + (n1z * b2x - n1x * b2z) * n2y
        y = y + (n1x * b2y - n1y * b2x) * n2z

        rinv = jax.lax.rsqrt(jnp.maximum(x * x + y * y, 1e-30))
        c1 = x * rinv                                   # cos(theta)
        s1 = y * rinv                                   # sin(theta)

        # V = v0 + sum_n k1_n sin(n*theta) + k2_n cos(n*theta)  (angle addition)
        V = row(12 + 2 * n_degs)
        s_n, c_n = s1, c1
        for n in range(n_degs):
            V = V + row(12 + n) * s_n + row(12 + n_degs + n) * c_n
            s_n, c_n = s_n * c1 + c_n * s1, c_n * c1 - s_n * s1

        # ---- scatter-add onto structures: per-structure compare + sublane
        # reduce (XLU).  Padded dihedrals carry bid == n_structures -> zero.
        bid = bid_ref[...]                               # (TR, 128) int32
        for s in range(n_structures):                    # static unroll
            contrib = jnp.where(bid == s, V, 0.0)        # (TR, 128)
            out_ref[s:s + 1, :] += jnp.sum(contrib, axis=0, keepdims=True)

    if gate:
        # Last split may own "overshoot" tiles (clamped in the index_map);
        # skip them so real dihedrals are not double-counted.
        tile_idx = pl.program_id(0) * tiles_per_split + pl.program_id(1)
        pl.when(tile_idx < num_tiles)(compute)
    else:
        compute()


def _round_up(n, m):
    return -(-n // m) * m


@functools.partial(jax.jit, static_argnames=("n_structures",))
def dihedral_energy(pos, mapping, atom_types, mapping_batch,
                    k1_table, k2_table, v0_table, *, n_structures):
    """Pallas implementation of Dihedral.forward (energy per structure)."""
    n_degs = k1_table.shape[0]
    n_dih = mapping.shape[1]

    if n_dih == 0:
        return jnp.zeros((n_structures,), jnp.float32)

    # ---------------- glue: gathers / parameter lookup (plain JAX) ----------
    p = jnp.concatenate([pos[mapping[a]].T for a in range(4)], axis=0)     # (12, N)
    it = [atom_types[mapping[a]] for a in range(4)]
    k1 = k1_table[:, it[0], it[1], it[2], it[3]]                           # (n_degs, N)
    k2 = k2_table[:, it[0], it[1], it[2], it[3]]                           # (n_degs, N)
    v0 = v0_table[it[0], it[1], it[2], it[3]][None, :]                     # (1, N)
    geom = jnp.concatenate([p, k1, k2, v0], axis=0).astype(jnp.float32)    # (C, N)

    tile = TILE_ROWS * LANE
    n_pad = _round_up(n_dih, tile)
    pad = n_pad - n_dih
    n_struct_pad = _round_up(max(n_structures, 1), 8)      # sublane multiple only

    # edge-pad: padded slots copy a real dihedral (finite geometry); they are
    # killed in the scatter because their batch id (== n_structures) never
    # matches a real structure row.
    geom = jnp.pad(geom, ((0, 0), (0, pad)), mode="edge")
    bid = jnp.pad(mapping_batch.astype(jnp.int32), (0, pad),
                  constant_values=n_structures)

    num_tiles = n_pad // tile
    n_ch = geom.shape[0]                                    # 13 + 2*n_degs

    # tile-major, per-tile-contiguous layout: (num_tiles, n_ch, TILE_ROWS, LANE)
    geom = jnp.transpose(geom.reshape(n_ch, num_tiles, TILE_ROWS, LANE),
                         (1, 0, 2, 3))
    bid = bid.reshape(num_tiles, TILE_ROWS, LANE)

    num_splits = NUM_SPLITS if num_tiles >= NUM_SPLITS else 1
    tiles_per_split = -(-num_tiles // num_splits)
    gate = tiles_per_split * num_splits != num_tiles

    def tile_index(c, t):
        idx = c * tiles_per_split + t
        if gate:
            idx = jnp.minimum(idx, num_tiles - 1)
        return idx

    kernel = functools.partial(_dihedral_kernel, n_degs=n_degs,
                               n_structures=n_structures,
                               tiles_per_split=tiles_per_split,
                               num_tiles=num_tiles, gate=gate)

    out = pl.pallas_call(
        kernel,
        out_shape=jax.ShapeDtypeStruct((num_splits, n_struct_pad, LANE),
                                       jnp.float32),
        grid=(num_splits, tiles_per_split),
        in_specs=[
            pl.BlockSpec((None, n_ch, TILE_ROWS, LANE),
                         lambda c, t: (tile_index(c, t), 0, 0, 0)),
            pl.BlockSpec((None, TILE_ROWS, LANE),
                         lambda c, t: (tile_index(c, t), 0, 0)),
        ],
        out_specs=pl.BlockSpec((None, n_struct_pad, LANE),
                               lambda c, t: (c, 0, 0)),
        compiler_params=pltpu.CompilerParams(
            dimension_semantics=("parallel", "arbitrary"),
            vmem_limit_bytes=32 * 1024 * 1024),
    )(geom, bid)

    # layout plumbing: sum per-core partials and the 128 lane slots
    return out.sum(axis=(0, 2))[:n_structures]


def _reference(pos, mapping, atom_types, mapping_batch,
               k1_table, k2_table, v0_table, n_structures):
    """Pure-JAX reference mirroring the torch forward (atan2 + sin/cos)."""
    p0, p1, p2, p3 = (pos[mapping[a]] for a in range(4))
    b1, b2, b3 = p1 - p0, p2 - p1, p3 - p2
    n1 = jnp.cross(b1, b2)
    n2 = jnp.cross(b2, b3)
    m1 = jnp.cross(n1, b2 / jnp.linalg.norm(b2, axis=1, keepdims=True))
    x = jnp.sum(n1 * n2, axis=1)
    y = jnp.sum(m1 * n2, axis=1)
    theta = jnp.arctan2(y, x)

    it = [atom_types[mapping[a]] for a in range(4)]
    k1 = k1_table[:, it[0], it[1], it[2], it[3]].T            # (N, n_degs)
    k2 = k2_table[:, it[0], it[1], it[2], it[3]].T
    v0 = v0_table[it[0], it[1], it[2], it[3]]
    n = jnp.arange(1, k1.shape[1] + 1, dtype=theta.dtype)
    ang = theta[:, None] * n[None, :]
    e = jnp.sum(k1 * jnp.sin(ang) + k2 * jnp.cos(ang), axis=1) + v0
    return jax.ops.segment_sum(e, mapping_batch, num_segments=n_structures)


if __name__ == "__main__":
    key = jax.random.PRNGKey(0)
    n_atoms, n_dih, n_struct, n_types, n_degs = 20, 16, 2, 3, 6
    k_pos, k_typ, k_k1, k_k2, k_v0 = jax.random.split(key, 5)

    # synthetic "AtomicData": positions, dihedral index_mapping, mapping_batch
    pos = 2.0 * jax.random.normal(k_pos, (n_atoms, 3), dtype=jnp.float32)
    mapping = jnp.stack([jnp.arange(n_dih, dtype=jnp.int32) + a
                         for a in range(4)], axis=0)          # (4, n_dih)
    atom_types = jax.random.randint(k_typ, (n_atoms,), 0, n_types)
    mapping_batch = jnp.concatenate(
        [jnp.zeros(n_dih // 2, jnp.int32), jnp.ones(n_dih - n_dih // 2, jnp.int32)])

    # deterministic synthetic parameter tables (same shapes as the buffers
    # registered in Dihedral.__init__: k1s/k2s (n_degs, T, T, T, T), v_0 (T,)*4)
    sizes = (n_types,) * 4
    k1_table = 0.5 * jax.random.normal(k_k1, (n_degs,) + sizes, dtype=jnp.float32)
    k2_table = 0.5 * jax.random.normal(k_k2, (n_degs,) + sizes, dtype=jnp.float32)
    v0_table = 0.1 * jax.random.normal(k_v0, sizes, dtype=jnp.float32)

    energy = dihedral_energy(pos, mapping, atom_types, mapping_batch,
                             k1_table, k2_table, v0_table,
                             n_structures=n_struct)
    energy = jax.block_until_ready(energy)

    ref = _reference(pos, mapping, atom_types, mapping_batch,
                     k1_table, k2_table, v0_table, n_struct)

    assert energy.shape == (n_struct,)
    assert jnp.allclose(energy, ref, rtol=1e-4, atol=1e-4), (energy, ref)
    print("KERNEL_OK")
</pallas_src>

<mosaic_0001>
module attributes {stable_mosaic.version = 11 : i64} {
  func.func @_dihedral_kernel(%arg0: i32, %arg1: i32, %arg2: memref<1x25x64x128xf32, #tpu.memory_space<vmem>>, %arg3: memref<1x64x128xi32, #tpu.memory_space<vmem>>, %arg4: memref<1x8x128xf32, #tpu.memory_space<vmem>>) attributes {dimension_semantics = [#tpu.dimension_semantics<parallel>, #tpu.dimension_semantics<arbitrary>], iteration_bounds = array<i64: 1, 1>, scalar_prefetch = 0 : i64, scratch_operands = 0 : i64, tpu.core_type = #tpu.core_type<tc>, window_params = [{transform_indices = @transform_0, window_bounds = array<i64: 1, 25, 64, 128>}, {transform_indices = @transform_1, window_bounds = array<i64: 1, 64, 128>}, {transform_indices = @transform_2, window_bounds = array<i64: 1, 8, 128>}]} {
    %c0_i32 = arith.constant 0 : i32
    %0 = arith.cmpi eq, %arg1, %c0_i32 : i32
    %1 = arith.extui %0 : i1 to i32
    %c0_i32_0 = arith.constant 0 : i32
    %2 = arith.cmpi ne, %1, %c0_i32_0 : i32
    scf.if %2 {
      %cst_123 = arith.constant 0.000000e+00 : f32
      %232 = vector.broadcast %cst_123 : f32 to vector<8x128xf32>
      %c0_124 = arith.constant 0 : index
      %c0_125 = arith.constant 0 : index
      %c0_126 = arith.constant 0 : index
      %233 = vector.load %arg4[%c0_124, %c0_125, %c0_126] : memref<1x8x128xf32, #tpu.memory_space<vmem>>, vector<1x8x128xf32>
      %234 = vector.shape_cast %233 : vector<1x8x128xf32> to vector<8x128xf32>
      %235 = vector.shape_cast %232 : vector<8x128xf32> to vector<1x8x128xf32>
      tpu.vector_store %arg4[%c0_124, %c0_125, %c0_126], %235 {strides = array<i32>} : memref<1x8x128xf32, #tpu.memory_space<vmem>>, vector<1x8x128xf32>,
    } else {
    }
    %c0 = arith.constant 0 : index
    %c3 = arith.constant 3 : index
    %c0_1 = arith.constant 0 : index
    %c0_2 = arith.constant 0 : index
    %3 = vector.load %arg2[%c0, %c3, %c0_1, %c0_2] : memref<1x25x64x128xf32, #tpu.memory_space<vmem>>, vector<1x1x64x128xf32>
    %4 = vector.shape_cast %3 : vector<1x1x64x128xf32> to vector<64x128xf32>
    %c0_3 = arith.constant 0 : index
    %c0_4 = arith.constant 0 : index
    %c0_5 = arith.constant 0 : index
    %c0_6 = arith.constant 0 : index
    %5 = vector.load %arg2[%c0_3, %c0_4, %c0_5, %c0_6] : memref<1x25x64x128xf32, #tpu.memory_space<vmem>>, vector<1x1x64x128xf32>
    %6 = vector.shape_cast %5 : vector<1x1x64x128xf32> to vector<64x128xf32>
    %7 = arith.subf %4, %6 : vector<64x128xf32>
    %c0_7 = arith.constant 0 : index
    %c4 = arith.constant 4 : index
    %c0_8 = arith.constant 0 : index
    %c0_9 = arith.constant 0 : index
    %8 = vector.load %arg2[%c0_7, %c4, %c0_8, %c0_9] : memref<1x25x64x128xf32, #tpu.memory_space<vmem>>, vector<1x1x64x128xf32>
    %9 = vector.shape_cast %8 : vector<1x1x64x128xf32> to vector<64x128xf32>
    %c0_10 = arith.constant 0 : index
    %c1 = arith.constant 1 : index
    %c0_11 = arith.constant 0 : index
    %c0_12 = arith.constant 0 : index
    %10 = vector.load %arg2[%c0_10, %c1, %c0_11, %c0_12] : memref<1x25x64x128xf32, #tpu.memory_space<vmem>>, vector<1x1x64x128xf32>
    %11 = vector.shape_cast %10 : vector<1x1x64x128xf32> to vector<64x128xf32>
    %12 = arith.subf %9, %11 : vector<64x128xf32>
    %c0_13 = arith.constant 0 : index
    %c5 = arith.constant 5 : index
    %c0_14 = arith.constant 0 : index
    %c0_15 = arith.constant 0 : index
    %13 = vector.load %arg2[%c0_13, %c5, %c0_14, %c0_15] : memref<1x25x64x128xf32, #tpu.memory_space<vmem>>, vector<1x1x64x128xf32>
    %14 = vector.shape_cast %13 : vector<1x1x64x128xf32> to vector<64x128xf32>
    %c0_16 = arith.constant 0 : index
    %c2 = arith.constant 2 : index
    %c0_17 = arith.constant 0 : index
    %c0_18 = arith.constant 0 : index
    %15 = vector.load %arg2[%c0_16, %c2, %c0_17, %c0_18] : memref<1x25x64x128xf32, #tpu.memory_space<vmem>>, vector<1x1x64x128xf32>
    %16 = vector.shape_cast %15 : vector<1x1x64x128xf32> to vector<64x128xf32>
    %17 = arith.subf %14, %16 : vector<64x128xf32>
    %c0_19 = arith.constant 0 : index
    %c6 = arith.constant 6 : index
    %c0_20 = arith.constant 0 : index
    %c0_21 = arith.constant 0 : index
    %18 = vector.load %arg2[%c0_19, %c6, %c0_20, %c0_21] : memref<1x25x64x128xf32, #tpu.memory_space<vmem>>, vector<1x1x64x128xf32>
    %19 = vector.shape_cast %18 : vector<1x1x64x128xf32> to vector<64x128xf32>
    %c0_22 = arith.constant 0 : index
    %c3_23 = arith.constant 3 : index
    %c0_24 = arith.constant 0 : index
    %c0_25 = arith.constant 0 : index
    %20 = vector.load %arg2[%c0_22, %c3_23, %c0_24, %c0_25] : memref<1x25x64x128xf32, #tpu.memory_space<vmem>>, vector<1x1x64x128xf32>
    %21 = vector.shape_cast %20 : vector<1x1x64x128xf32> to vector<64x128xf32>
    %22 = arith.subf %19, %21 : vector<64x128xf32>
    %c0_26 = arith.constant 0 : index
    %c7 = arith.constant 7 : index
    %c0_27 = arith.constant 0 : index
    %c0_28 = arith.constant 0 : index
    %23 = vector.load %arg2[%c0_26, %c7, %c0_27, %c0_28] : memref<1x25x64x128xf32, #tpu.memory_space<vmem>>, vector<1x1x64x128xf32>
    %24 = vector.shape_cast %23 : vector<1x1x64x128xf32> to vector<64x128xf32>
    %c0_29 = arith.constant 0 : index
    %c4_30 = arith.constant 4 : index
    %c0_31 = arith.constant 0 : index
    %c0_32 = arith.constant 0 : index
    %25 = vector.load %arg2[%c0_29, %c4_30, %c0_31, %c0_32] : memref<1x25x64x128xf32, #tpu.memory_space<vmem>>, vector<1x1x64x128xf32>
    %26 = vector.shape_cast %25 : vector<1x1x64x128xf32> to vector<64x128xf32>
    %27 = arith.subf %24, %26 : vector<64x128xf32>
    %c0_33 = arith.constant 0 : index
    %c8 = arith.constant 8 : index
    %c0_34 = arith.constant 0 : index
    %c0_35 = arith.constant 0 : index
    %28 = vector.load %arg2[%c0_33, %c8, %c0_34, %c0_35] : memref<1x25x64x128xf32, #tpu.memory_space<vmem>>, vector<1x1x64x128xf32>
    %29 = vector.shape_cast %28 : vector<1x1x64x128xf32> to vector<64x128xf32>
    %c0_36 = arith.constant 0 : index
    %c5_37 = arith.constant 5 : index
    %c0_38 = arith.constant 0 : index
    %c0_39 = arith.constant 0 : index
    %30 = vector.load %arg2[%c0_36, %c5_37, %c0_38, %c0_39] : memref<1x25x64x128xf32, #tpu.memory_space<vmem>>, vector<1x1x64x128xf32>
    %31 = vector.shape_cast %30 : vector<1x1x64x128xf32> to vector<64x128xf32>
    %32 = arith.subf %29, %31 : vector<64x128xf32>
    %c0_40 = arith.constant 0 : index
    %c9 = arith.constant 9 : index
    %c0_41 = arith.constant 0 : index
    %c0_42 = arith.constant 0 : index
    %33 = vector.load %arg2[%c0_40, %c9, %c0_41, %c0_42] : memref<1x25x64x128xf32, #tpu.memory_space<vmem>>, vector<1x1x64x128xf32>
    %34 = vector.shape_cast %33 : vector<1x1x64x128xf32> to vector<64x128xf32>
    %c0_43 = arith.constant 0 : index
    %c6_44 = arith.constant 6 : index
    %c0_45 = arith.constant 0 : index
    %c0_46 = arith.constant 0 : index
    %35 = vector.load %arg2[%c0_43, %c6_44, %c0_45, %c0_46] : memref<1x25x64x128xf32, #tpu.memory_space<vmem>>, vector<1x1x64x128xf32>
    %36 = vector.shape_cast %35 : vector<1x1x64x128xf32> to vector<64x128xf32>
    %37 = arith.subf %34, %36 : vector<64x128xf32>
    %c0_47 = arith.constant 0 : index
    %c10 = arith.constant 10 : index
    %c0_48 = arith.constant 0 : index
    %c0_49 = arith.constant 0 : index
    %38 = vector.load %arg2[%c0_47, %c10, %c0_48, %c0_49] : memref<1x25x64x128xf32, #tpu.memory_space<vmem>>, vector<1x1x64x128xf32>
    %39 = vector.shape_cast %38 : vector<1x1x64x128xf32> to vector<64x128xf32>
    %c0_50 = arith.constant 0 : index
    %c7_51 = arith.constant 7 : index
    %c0_52 = arith.constant 0 : index
    %c0_53 = arith.constant 0 : index
    %40 = vector.load %arg2[%c0_50, %c7_51, %c0_52, %c0_53] : memref<1x25x64x128xf32, #tpu.memory_space<vmem>>, vector<1x1x64x128xf32>
    %41 = vector.shape_cast %40 : vector<1x1x64x128xf32> to vector<64x128xf32>
    %42 = arith.subf %39, %41 : vector<64x128xf32>
    %c0_54 = arith.constant 0 : index
    %c11 = arith.constant 11 : index
    %c0_55 = arith.constant 0 : index
    %c0_56 = arith.constant 0 : index
    %43 = vector.load %arg2[%c0_54, %c11, %c0_55, %c0_56] : memref<1x25x64x128xf32, #tpu.memory_space<vmem>>, vector<1x1x64x128xf32>
    %44 = vector.shape_cast %43 : vector<1x1x64x128xf32> to vector<64x128xf32>
    %c0_57 = arith.constant 0 : index
    %c8_58 = arith.constant 8 : index
    %c0_59 = arith.constant 0 : index
    %c0_60 = arith.constant 0 : index
    %45 = vector.load %arg2[%c0_57, %c8_58, %c0_59, %c0_60] : memref<1x25x64x128xf32, #tpu.memory_space<vmem>>, vector<1x1x64x128xf32>
    %46 = vector.shape_cast %45 : vector<1x1x64x128xf32> to vector<64x128xf32>
    %47 = arith.subf %44, %46 : vector<64x128xf32>
    %48 = arith.mulf %12, %32 : vector<64x128xf32>
    %49 = arith.mulf %17, %27 : vector<64x128xf32>
    %50 = arith.subf %48, %49 : vector<64x128xf32>
    %51 = arith.mulf %17, %22 : vector<64x128xf32>
    %52 = arith.mulf %7, %32 : vector<64x128xf32>
    %53 = arith.subf %51, %52 : vector<64x128xf32>
    %54 = arith.mulf %7, %27 : vector<64x128xf32>
    %55 = arith.mulf %12, %22 : vector<64x128xf32>
    %56 = arith.subf %54, %55 : vector<64x128xf32>
    %57 = arith.mulf %27, %47 : vector<64x128xf32>
    %58 = arith.mulf %32, %42 : vector<64x128xf32>
    %59 = arith.subf %57, %58 : vector<64x128xf32>
    %60 = arith.mulf %32, %37 : vector<64x128xf32>
    %61 = arith.mulf %22, %47 : vector<64x128xf32>
    %62 = arith.subf %60, %61 : vector<64x128xf32>
    %63 = arith.mulf %22, %42 : vector<64x128xf32>
    %64 = arith.mulf %27, %37 : vector<64x128xf32>
    %65 = arith.subf %63, %64 : vector<64x128xf32>
    %66 = arith.mulf %50, %50 : vector<64x128xf32>
    %67 = arith.mulf %53, %53 : vector<64x128xf32>
    %68 = arith.addf %66, %67 : vector<64x128xf32>
    %69 = arith.mulf %56, %56 : vector<64x128xf32>
    %70 = arith.addf %68, %69 : vector<64x128xf32>
    %cst = arith.constant 1.000000e-30 : f32
    %71 = vector.broadcast %cst : f32 to vector<64x128xf32>
    %72 = arith.maximumf %70, %71 : vector<64x128xf32>
    %73 = math.rsqrt %72 : vector<64x128xf32>
    %74 = arith.mulf %59, %59 : vector<64x128xf32>
    %75 = arith.mulf %62, %62 : vector<64x128xf32>
    %76 = arith.addf %74, %75 : vector<64x128xf32>
    %77 = arith.mulf %65, %65 : vector<64x128xf32>
    %78 = arith.addf %76, %77 : vector<64x128xf32>
    %cst_61 = arith.constant 1.000000e-30 : f32
    %79 = vector.broadcast %cst_61 : f32 to vector<64x128xf32>
    %80 = arith.maximumf %78, %79 : vector<64x128xf32>
    %81 = math.rsqrt %80 : vector<64x128xf32>
    %82 = arith.mulf %22, %22 : vector<64x128xf32>
    %83 = arith.mulf %27, %27 : vector<64x128xf32>
    %84 = arith.addf %82, %83 : vector<64x128xf32>
    %85 = arith.mulf %32, %32 : vector<64x128xf32>
    %86 = arith.addf %84, %85 : vector<64x128xf32>
    %cst_62 = arith.constant 1.000000e-30 : f32
    %87 = vector.broadcast %cst_62 : f32 to vector<64x128xf32>
    %88 = arith.maximumf %86, %87 : vector<64x128xf32>
    %89 = math.rsqrt %88 : vector<64x128xf32>
    %90 = arith.mulf %50, %73 : vector<64x128xf32>
    %91 = arith.mulf %53, %73 : vector<64x128xf32>
    %92 = arith.mulf %56, %73 : vector<64x128xf32>
    %93 = arith.mulf %59, %81 : vector<64x128xf32>
    %94 = arith.mulf %62, %81 : vector<64x128xf32>
    %95 = arith.mulf %65, %81 : vector<64x128xf32>
    %96 = arith.mulf %22, %89 : vector<64x128xf32>
    %97 = arith.mulf %27, %89 : vector<64x128xf32>
    %98 = arith.mulf %32, %89 : vector<64x128xf32>
    %99 = arith.mulf %90, %93 : vector<64x128xf32>
    %100 = arith.mulf %91, %94 : vector<64x128xf32>
    %101 = arith.addf %99, %100 : vector<64x128xf32>
    %102 = arith.mulf %92, %95 : vector<64x128xf32>
    %103 = arith.addf %101, %102 : vector<64x128xf32>
    %104 = arith.mulf %91, %98 : vector<64x128xf32>
    %105 = arith.mulf %92, %97 : vector<64x128xf32>
    %106 = arith.subf %104, %105 : vector<64x128xf32>
    %107 = arith.mulf %106, %93 : vector<64x128xf32>
    %108 = arith.mulf %92, %96 : vector<64x128xf32>
    %109 = arith.mulf %90, %98 : vector<64x128xf32>
    %110 = arith.subf %108, %109 : vector<64x128xf32>
    %111 = arith.mulf %110, %94 : vector<64x128xf32>
    %112 = arith.addf %107, %111 : vector<64x128xf32>
    %113 = arith.mulf %90, %97 : vector<64x128xf32>
    %114 = arith.mulf %91, %96 : vector<64x128xf32>
    %115 = arith.subf %113, %114 : vector<64x128xf32>
    %116 = arith.mulf %115, %95 : vector<64x128xf32>
    %117 = arith.addf %112, %116 : vector<64x128xf32>
    %118 = arith.mulf %103, %103 : vector<64x128xf32>
    %119 = arith.mulf %117, %117 : vector<64x128xf32>
    %120 = arith.addf %118, %119 : vector<64x128xf32>
    %cst_63 = arith.constant 1.000000e-30 : f32
    %121 = vector.broadcast %cst_63 : f32 to vector<64x128xf32>
    %122 = arith.maximumf %120, %121 : vector<64x128xf32>
    %123 = math.rsqrt %122 : vector<64x128xf32>
    %124 = arith.mulf %103, %123 : vector<64x128xf32>
    %125 = arith.mulf %117, %123 : vector<64x128xf32>
    %c0_64 = arith.constant 0 : index
    %c24 = arith.constant 24 : index
    %c0_65 = arith.constant 0 : index
    %c0_66 = arith.constant 0 : index
    %126 = vector.load %arg2[%c0_64, %c24, %c0_65, %c0_66] : memref<1x25x64x128xf32, #tpu.memory_space<vmem>>, vector<1x1x64x128xf32>
    %127 = vector.shape_cast %126 : vector<1x1x64x128xf32> to vector<64x128xf32>
    %c0_67 = arith.constant 0 : index
    %c12 = arith.constant 12 : index
    %c0_68 = arith.constant 0 : index
    %c0_69 = arith.constant 0 : index
    %128 = vector.load %arg2[%c0_67, %c12, %c0_68, %c0_69] : memref<1x25x64x128xf32, #tpu.memory_space<vmem>>, vector<1x1x64x128xf32>
    %129 = vector.shape_cast %128 : vector<1x1x64x128xf32> to vector<64x128xf32>
    %130 = arith.mulf %129, %125 : vector<64x128xf32>
    %131 = arith.addf %127, %130 : vector<64x128xf32>
    %c0_70 = arith.constant 0 : index
    %c18 = arith.constant 18 : index
    %c0_71 = arith.constant 0 : index
    %c0_72 = arith.constant 0 : index
    %132 = vector.load %arg2[%c0_70, %c18, %c0_71, %c0_72] : memref<1x25x64x128xf32, #tpu.memory_space<vmem>>, vector<1x1x64x128xf32>
    %133 = vector.shape_cast %132 : vector<1x1x64x128xf32> to vector<64x128xf32>
    %134 = arith.mulf %133, %124 : vector<64x128xf32>
    %135 = arith.addf %131, %134 : vector<64x128xf32>
    %136 = arith.mulf %125, %124 : vector<64x128xf32>
    %137 = arith.mulf %124, %125 : vector<64x128xf32>
    %138 = arith.addf %136, %137 : vector<64x128xf32>
    %139 = arith.mulf %124, %124 : vector<64x128xf32>
    %140 = arith.mulf %125, %125 : vector<64x128xf32>
    %141 = arith.subf %139, %140 : vector<64x128xf32>
    %c0_73 = arith.constant 0 : index
    %c13 = arith.constant 13 : index
    %c0_74 = arith.constant 0 : index
    %c0_75 = arith.constant 0 : index
    %142 = vector.load %arg2[%c0_73, %c13, %c0_74, %c0_75] : memref<1x25x64x128xf32, #tpu.memory_space<vmem>>, vector<1x1x64x128xf32>
    %143 = vector.shape_cast %142 : vector<1x1x64x128xf32> to vector<64x128xf32>
    %144 = arith.mulf %143, %138 : vector<64x128xf32>
    %145 = arith.addf %135, %144 : vector<64x128xf32>
    %c0_76 = arith.constant 0 : index
    %c19 = arith.constant 19 : index
    %c0_77 = arith.constant 0 : index
    %c0_78 = arith.constant 0 : index
    %146 = vector.load %arg2[%c0_76, %c19, %c0_77, %c0_78] : memref<1x25x64x128xf32, #tpu.memory_space<vmem>>, vector<1x1x64x128xf32>
    %147 = vector.shape_cast %146 : vector<1x1x64x128xf32> to vector<64x128xf32>
    %148 = arith.mulf %147, %141 : vector<64x128xf32>
    %149 = arith.addf %145, %148 : vector<64x128xf32>
    %150 = arith.mulf %138, %124 : vector<64x128xf32>
    %151 = arith.mulf %141, %125 : vector<64x128xf32>
    %152 = arith.addf %150, %151 : vector<64x128xf32>
    %153 = arith.mulf %141, %124 : vector<64x128xf32>
    %154 = arith.mulf %138, %125 : vector<64x128xf32>
    %155 = arith.subf %153, %154 : vector<64x128xf32>
    %c0_79 = arith.constant 0 : index
    %c14 = arith.constant 14 : index
    %c0_80 = arith.constant 0 : index
    %c0_81 = arith.constant 0 : index
    %156 = vector.load %arg2[%c0_79, %c14, %c0_80, %c0_81] : memref<1x25x64x128xf32, #tpu.memory_space<vmem>>, vector<1x1x64x128xf32>
    %157 = vector.shape_cast %156 : vector<1x1x64x128xf32> to vector<64x128xf32>
    %158 = arith.mulf %157, %152 : vector<64x128xf32>
    %159 = arith.addf %149, %158 : vector<64x128xf32>
    %c0_82 = arith.constant 0 : index
    %c20 = arith.constant 20 : index
    %c0_83 = arith.constant 0 : index
    %c0_84 = arith.constant 0 : index
    %160 = vector.load %arg2[%c0_82, %c20, %c0_83, %c0_84] : memref<1x25x64x128xf32, #tpu.memory_space<vmem>>, vector<1x1x64x128xf32>
    %161 = vector.shape_cast %160 : vector<1x1x64x128xf32> to vector<64x128xf32>
    %162 = arith.mulf %161, %155 : vector<64x128xf32>
    %163 = arith.addf %159, %162 : vector<64x128xf32>
    %164 = arith.mulf %152, %124 : vector<64x128xf32>
    %165 = arith.mulf %155, %125 : vector<64x128xf32>
    %166 = arith.addf %164, %165 : vector<64x128xf32>
    %167 = arith.mulf %155, %124 : vector<64x128xf32>
    %168 = arith.mulf %152, %125 : vector<64x128xf32>
    %169 = arith.subf %167, %168 : vector<64x128xf32>
    %c0_85 = arith.constant 0 : index
    %c15 = arith.constant 15 : index
    %c0_86 = arith.constant 0 : index
    %c0_87 = arith.constant 0 : index
    %170 = vector.load %arg2[%c0_85, %c15, %c0_86, %c0_87] : memref<1x25x64x128xf32, #tpu.memory_space<vmem>>, vector<1x1x64x128xf32>
    %171 = vector.shape_cast %170 : vector<1x1x64x128xf32> to vector<64x128xf32>
    %172 = arith.mulf %171, %166 : vector<64x128xf32>
    %173 = arith.addf %163, %172 : vector<64x128xf32>
    %c0_88 = arith.constant 0 : index
    %c21 = arith.constant 21 : index
    %c0_89 = arith.constant 0 : index
    %c0_90 = arith.constant 0 : index
    %174 = vector.load %arg2[%c0_88, %c21, %c0_89, %c0_90] : memref<1x25x64x128xf32, #tpu.memory_space<vmem>>, vector<1x1x64x128xf32>
    %175 = vector.shape_cast %174 : vector<1x1x64x128xf32> to vector<64x128xf32>
    %176 = arith.mulf %175, %169 : vector<64x128xf32>
    %177 = arith.addf %173, %176 : vector<64x128xf32>
    %178 = arith.mulf %166, %124 : vector<64x128xf32>
    %179 = arith.mulf %169, %125 : vector<64x128xf32>
    %180 = arith.addf %178, %179 : vector<64x128xf32>
    %181 = arith.mulf %169, %124 : vector<64x128xf32>
    %182 = arith.mulf %166, %125 : vector<64x128xf32>
    %183 = arith.subf %181, %182 : vector<64x128xf32>
    %c0_91 = arith.constant 0 : index
    %c16 = arith.constant 16 : index
    %c0_92 = arith.constant 0 : index
    %c0_93 = arith.constant 0 : index
    %184 = vector.load %arg2[%c0_91, %c16, %c0_92, %c0_93] : memref<1x25x64x128xf32, #tpu.memory_space<vmem>>, vector<1x1x64x128xf32>
    %185 = vector.shape_cast %184 : vector<1x1x64x128xf32> to vector<64x128xf32>
    %186 = arith.mulf %185, %180 : vector<64x128xf32>
    %187 = arith.addf %177, %186 : vector<64x128xf32>
    %c0_94 = arith.constant 0 : index
    %c22 = arith.constant 22 : index
    %c0_95 = arith.constant 0 : index
    %c0_96 = arith.constant 0 : index
    %188 = vector.load %arg2[%c0_94, %c22, %c0_95, %c0_96] : memref<1x25x64x128xf32, #tpu.memory_space<vmem>>, vector<1x1x64x128xf32>
    %189 = vector.shape_cast %188 : vector<1x1x64x128xf32> to vector<64x128xf32>
    %190 = arith.mulf %189, %183 : vector<64x128xf32>
    %191 = arith.addf %187, %190 : vector<64x128xf32>
    %192 = arith.mulf %180, %124 : vector<64x128xf32>
    %193 = arith.mulf %183, %125 : vector<64x128xf32>
    %194 = arith.addf %192, %193 : vector<64x128xf32>
    %195 = arith.mulf %183, %124 : vector<64x128xf32>
    %196 = arith.mulf %180, %125 : vector<64x128xf32>
    %197 = arith.subf %195, %196 : vector<64x128xf32>
    %c0_97 = arith.constant 0 : index
    %c17 = arith.constant 17 : index
    %c0_98 = arith.constant 0 : index
    %c0_99 = arith.constant 0 : index
    %198 = vector.load %arg2[%c0_97, %c17, %c0_98, %c0_99] : memref<1x25x64x128xf32, #tpu.memory_space<vmem>>, vector<1x1x64x128xf32>
    %199 = vector.shape_cast %198 : vector<1x1x64x128xf32> to vector<64x128xf32>
    %200 = arith.mulf %199, %194 : vector<64x128xf32>
    %201 = arith.addf %191, %200 : vector<64x128xf32>
    %c0_100 = arith.constant 0 : index
    %c23 = arith.constant 23 : index
    %c0_101 = arith.constant 0 : index
    %c0_102 = arith.constant 0 : index
    %202 = vector.load %arg2[%c0_100, %c23, %c0_101, %c0_102] : memref<1x25x64x128xf32, #tpu.memory_space<vmem>>, vector<1x1x64x128xf32>
    %203 = vector.shape_cast %202 : vector<1x1x64x128xf32> to vector<64x128xf32>
    %204 = arith.mulf %203, %197 : vector<64x128xf32>
    %205 = arith.addf %201, %204 : vector<64x128xf32>
    %c0_103 = arith.constant 0 : index
    %c0_104 = arith.constant 0 : index
    %c0_105 = arith.constant 0 : index
    %206 = vector.load %arg3[%c0_103, %c0_104, %c0_105] : memref<1x64x128xi32, #tpu.memory_space<vmem>>, vector<1x64x128xi32>
    %207 = vector.shape_cast %206 : vector<1x64x128xi32> to vector<64x128xi32>
    %c0_i32_106 = arith.constant 0 : i32
    %208 = vector.broadcast %c0_i32_106 : i32 to vector<64x128xi32>
    %209 = arith.cmpi eq, %207, %208 : vector<64x128xi32>
    %cst_107 = arith.constant 0.000000e+00 : f32
    %210 = vector.broadcast %cst_107 : f32 to vector<64x128xf32>
    %211 = arith.select %209, %205, %210 : vector<64x128xi1>, vector<64x128xf32>
    %c0_108 = arith.constant 0 : index
    %c0_109 = arith.constant 0 : index
    %c0_110 = arith.constant 0 : index
    %212 = vector.load %arg4[%c0_108, %c0_109, %c0_110] : memref<1x8x128xf32, #tpu.memory_space<vmem>>, vector<1x1x128xf32>
    %213 = vector.shape_cast %212 : vector<1x1x128xf32> to vector<1x128xf32>
    %cst_111 = arith.constant dense<0.000000e+00> : vector<128xf32>
    %214 = vector.multi_reduction <add>, %211, %cst_111 [0] : vector<64x128xf32> to vector<128xf32>
    %215 = vector.shape_cast %214 : vector<128xf32> to vector<1x128xf32>
    %216 = arith.addf %213, %215 : vector<1x128xf32>
    %c0_112 = arith.constant 0 : index
    %c0_113 = arith.constant 0 : index
    %c0_114 = arith.constant 0 : index
    %217 = vector.load %arg4[%c0_112, %c0_113, %c0_114] : memref<1x8x128xf32, #tpu.memory_space<vmem>>, vector<1x1x128xf32>
    %218 = vector.shape_cast %217 : vector<1x1x128xf32> to vector<1x128xf32>
    %219 = vector.shape_cast %216 : vector<1x128xf32> to vector<1x1x128xf32>
    tpu.vector_store %arg4[%c0_112, %c0_113, %c0_114], %219 {strides = array<i32>} : memref<1x8x128xf32, #tpu.memory_space<vmem>>, vector<1x1x128xf32>,
    %c1_i32 = arith.constant 1 : i32
    %220 = vector.broadcast %c1_i32 : i32 to vector<64x128xi32>
    %221 = arith.cmpi eq, %207, %220 : vector<64x128xi32>
    %cst_115 = arith.constant 0.000000e+00 : f32
    %222 = vector.broadcast %cst_115 : f32 to vector<64x128xf32>
    %223 = arith.select %221, %205, %222 : vector<64x128xi1>, vector<64x128xf32>
    %c0_116 = arith.constant 0 : index
    %c1_117 = arith.constant 1 : index
    %c0_118 = arith.constant 0 : index
    %224 = vector.load %arg4[%c0_116, %c1_117, %c0_118] : memref<1x8x128xf32, #tpu.memory_space<vmem>>, vector<1x1x128xf32>
    %225 = vector.shape_cast %224 : vector<1x1x128xf32> to vector<1x128xf32>
    %cst_119 = arith.constant dense<0.000000e+00> : vector<128xf32>
    %226 = vector.multi_reduction <add>, %223, %cst_119 [0] : vector<64x128xf32> to vector<128xf32>
    %227 = vector.shape_cast %226 : vector<128xf32> to vector<1x128xf32>
    %228 = arith.addf %225, %227 : vector<1x128xf32>
    %c0_120 = arith.constant 0 : index
    %c1_121 = arith.constant 1 : index
    %c0_122 = arith.constant 0 : index
    %229 = vector.load %arg4[%c0_120, %c1_121, %c0_122] : memref<1x8x128xf32, #tpu.memory_space<vmem>>, vector<1x1x128xf32>
    %230 = vector.shape_cast %229 : vector<1x1x128xf32> to vector<1x128xf32>
    %231 = vector.shape_cast %228 : vector<1x128xf32> to vector<1x1x128xf32>
    tpu.vector_store %arg4[%c0_120, %c1_121, %c0_122], %231 {strides = array<i32>} : memref<1x8x128xf32, #tpu.memory_space<vmem>>, vector<1x1x128xf32>,
    return
  }
  func.func @transform_0(%arg0: i32, %arg1: i32) -> (i32, i32, i32, i32) {
    %c1_i32 = arith.constant 1 : i32
    %0 = arith.muli %arg0, %c1_i32 : i32
    %1 = arith.addi %0, %arg1 : i32
    %c0_i32 = arith.constant 0 : i32
    %c0_i32_0 = arith.constant 0 : i32
    %c0_i32_1 = arith.constant 0 : i32
    %c0_i32_2 = arith.constant 0 : i32
    return %1, %c0_i32, %c0_i32_0, %c0_i32_1 : i32, i32, i32, i32
  }
  func.func @transform_1(%arg0: i32, %arg1: i32) -> (i32, i32, i32) {
    %c1_i32 = arith.constant 1 : i32
    %0 = arith.muli %arg0, %c1_i32 : i32
    %1 = arith.addi %0, %arg1 : i32
    %c0_i32 = arith.constant 0 : i32
    %c0_i32_0 = arith.constant 0 : i32
    %c0_i32_1 = arith.constant 0 : i32
    return %1, %c0_i32, %c0_i32_0 : i32, i32, i32
  }
  func.func @transform_2(%arg0: i32, %arg1: i32) -> (i32, i32, i32) {
    %c0_i32 = arith.constant 0 : i32
    %c0_i32_0 = arith.constant 0 : i32
    %c0_i32_1 = arith.constant 0 : i32
    return %arg0, %c0_i32, %c0_i32_0 : i32, i32, i32
  }
}

</mosaic_0001>

<llo_original>
// kernel: dihedral_energy.1
$region0: #{dihedral_energy.1}
  #allocation0 [shape = 'u32[]', space=smem, size = 0x4, offset = 0x4, fixed_abs, tag = 'smem constant byte address 0x4 - core index']
  #allocation1 [shape = 'u32[72,128]{1,0:T(1,128)}', space=vmem, size = 0x9000, scoped, tag = 'internal scratch']
  %s0 = inlined_call_operand.vmem [shape: f32[1,25,64,128], index: 0, kind: input, shape index: {}]
  %s1 = inlined_call_operand.vmem [shape: s32[1,64,128], index: 1, kind: input, shape index: {}]
  %s2 = inlined_call_operand.vmem [shape: f32[1,8,128], index: 2, kind: output, shape index: {}]
  %s3 = sld [smem:[#allocation0]]
  $region22: #{dihedral_energy.1} parent=0
    _
  %s5 = ssub.s32 1, %s3
  %s6 = scalar_select 0, %s5, %s3
  // Predicated region
  $region2: #{dihedral_energy.1} parent=0 // pred_check
    _
  $region3: #{dihedral_energy.1} parent=0 // pred_check_branch
    %8 = sbr.rel (0) target = $region5
  $region4: #{dihedral_energy.1} parent=0 // pred_region
    %s9 = sadd.s32 0, 0
    %p10 = scmp.lt.s32.totalorder %s9, 0
    %s11 = scalar_select %p10, %s9, 0
    %s12 = smul.addr %s11, 200
    %s13 = smul.addr %s12, 8
    %s14 = scalar_lea.vmem %s0, %s13
    %s15 = sadd.s32 0, 0
  $region5: #{dihedral_energy.1} parent=0 // pred_fallthru
    _
  // Predicated region
  $region6: #{dihedral_energy.1} parent=0 // pred_check
    _
  $region7: #{dihedral_energy.1} parent=0 // pred_check_branch
    %17 = sbr.rel (0) target = $region9
  $region8: #{dihedral_energy.1} parent=0 // pred_region
    %s18 = sadd.s32 0, 0
    %p19 = scmp.lt.s32.totalorder %s18, 0
    %s20 = scalar_select %p19, %s18, 0
    %s21 = smul.addr %s20, 8
    %s22 = smul.addr %s21, 8
    %s23 = scalar_lea.vmem %s1, %s22
    %s24 = sadd.s32 0, 0
  $region9: #{dihedral_energy.1} parent=0 // pred_fallthru
    _
  %s25 = sadd.s32 0, 0
  %p26 = scmp.lt.s32.totalorder %s25, 0
  %s27 = scalar_select %p26, %s25, 0
  %s28 = smul.addr %s27, 200
  %s29 = smul.addr %s28, 8
  %s30 = scalar_lea.vmem %s0, %s29
  %s31 = sadd.s32 0, 0
  %p32 = scmp.lt.s32.totalorder %s31, 0
  %s33 = scalar_select %p32, %s31, 0
  %s34 = smul.addr %s33, 8
  %s35 = smul.addr %s34, 8
  %s36 = scalar_lea.vmem %s1, %s35
  %s37 = sadd.s32 0, 0
  %p38 = scmp.lt.s32.totalorder %s37, 0
  %s39 = scalar_select %p38, %s37, 0
  %s40 = smul.addr %s39, 200
  %s41 = smul.addr %s40, 8
  %s42 = scalar_lea.vmem %s0, %s41
  %s43 = sadd.s32 0, 0
  %s44 = sadd.s32 0, 0
  %p45 = scmp.lt.s32.totalorder %s44, 0
  %s46 = scalar_select %p45, %s44, 0
  %s47 = smul.addr %s46, 8
  %s48 = smul.addr %s47, 8
  %s49 = scalar_lea.vmem %s1, %s48
  %s50 = sadd.s32 0, 0
  %p51 = scmp.eq.s32.totalorder 0, 0
  // Predicated region
  $region10: #{dihedral_energy.1} parent=0 // pred_check
    %p52 = pneg %p51
  $region11: #{dihedral_energy.1} parent=0 // pred_check_branch
    %54 = sbr.rel (%p52) target = $region13
  $region12: #{dihedral_energy.1} parent=0 // pred_region
    %55 = vst [vmem:[%s2] sm:$0xff] 0.0
  $region13: #{dihedral_energy.1} parent=0 // pred_fallthru
    _
  %s56 = scalar_lea.vmem %s42, 192
  %v57 = vld [vmem:[%s56] sm:$0xff]
  %v58 = vld [vmem:[%s56 + $0x8] sm:$0xff]
  %v59 = vld [vmem:[%s56 + $0x10] sm:$0xff]
  %v60 = vld [vmem:[%s56 + $0x18] sm:$0xff]
  %v61 = vld [vmem:[%s56 + $0x20] sm:$0xff]
  %v62 = vld [vmem:[%s56 + $0x28] sm:$0xff]
  %v63 = vld [vmem:[%s56 + $0x30] sm:$0xff]
  %v64 = vld [vmem:[%s56 + $0x38] sm:$0xff]
  %v65 = vld [vmem:[%s42] sm:$0xff]
  %v66 = vld [vmem:[%s42 + $0x8] sm:$0xff]
  %v67 = vld [vmem:[%s42 + $0x10] sm:$0xff]
  %v68 = vld [vmem:[%s42 + $0x18] sm:$0xff]
  %v69 = vld [vmem:[%s42 + $0x20] sm:$0xff]
  %v70 = vld [vmem:[%s42 + $0x28] sm:$0xff]
  %v71 = vld [vmem:[%s42 + $0x30] sm:$0xff]
  %v72 = vld [vmem:[%s42 + $0x38] sm:$0xff]
  %v73 = vsub.f32 %v57, %v65
  %v74 = vsub.f32 %v58, %v66
  %v75 = vsub.f32 %v59, %v67
  %v76 = vsub.f32 %v60, %v68
  %v77 = vsub.f32 %v61, %v69
  %v78 = vsub.f32 %v62, %v70
  %v79 = vsub.f32 %v63, %v71
  %v80 = vsub.f32 %v64, %v72
  %s81 = scalar_lea.vmem %s42, 256
  %v82 = vld [vmem:[%s81] sm:$0xff]
  %v83 = vld [vmem:[%s81 + $0x8] sm:$0xff]
  %v84 = vld [vmem:[%s81 + $0x10] sm:$0xff]
  %v85 = vld [vmem:[%s81 + $0x18] sm:$0xff]
  %v86 = vld [vmem:[%s81 + $0x20] sm:$0xff]
  %v87 = vld [vmem:[%s81 + $0x28] sm:$0xff]
  %v88 = vld [vmem:[%s81 + $0x30] sm:$0xff]
  %v89 = vld [vmem:[%s81 + $0x38] sm:$0xff]
  %s90 = scalar_lea.vmem %s42, 64
  %v91 = vld [vmem:[%s90] sm:$0xff]
  %v92 = vld [vmem:[%s90 + $0x8] sm:$0xff]
  %v93 = vld [vmem:[%s90 + $0x10] sm:$0xff]
  %v94 = vld [vmem:[%s90 + $0x18] sm:$0xff]
  %v95 = vld [vmem:[%s90 + $0x20] sm:$0xff]
  %v96 = vld [vmem:[%s90 + $0x28] sm:$0xff]
  %v97 = vld [vmem:[%s90 + $0x30] sm:$0xff]
  %v98 = vld [vmem:[%s90 + $0x38] sm:$0xff]
  %v99 = vsub.f32 %v82, %v91
  %v100 = vsub.f32 %v83, %v92
  %v101 = vsub.f32 %v84, %v93
  %v102 = vsub.f32 %v85, %v94
  %v103 = vsub.f32 %v86, %v95
  %v104 = vsub.f32 %v87, %v96
  %v105 = vsub.f32 %v88, %v97
  %v106 = vsub.f32 %v89, %v98
  %s107 = scalar_lea.vmem %s42, 320
  %v108 = vld [vmem:[%s107] sm:$0xff]
  %v109 = vld [vmem:[%s107 + $0x8] sm:$0xff]
  %v110 = vld [vmem:[%s107 + $0x10] sm:$0xff]
  %v111 = vld [vmem:[%s107 + $0x18] sm:$0xff]
  %v112 = vld [vmem:[%s107 + $0x20] sm:$0xff]
  %v113 = vld [vmem:[%s107 + $0x28] sm:$0xff]
  %v114 = vld [vmem:[%s107 + $0x30] sm:$0xff]
  %v115 = vld [vmem:[%s107 + $0x38] sm:$0xff]
  %s116 = scalar_lea.vmem %s42, 128
  %v117 = vld [vmem:[%s116] sm:$0xff]
  %v118 = vld [vmem:[%s116 + $0x8] sm:$0xff]
  %v119 = vld [vmem:[%s116 + $0x10] sm:$0xff]
  %v120 = vld [vmem:[%s116 + $0x18] sm:$0xff]
  %v121 = vld [vmem:[%s116 + $0x20] sm:$0xff]
  %v122 = vld [vmem:[%s116 + $0x28] sm:$0xff]
  %v123 = vld [vmem:[%s116 + $0x30] sm:$0xff]
  %v124 = vld [vmem:[%s116 + $0x38] sm:$0xff]
  %v125 = vsub.f32 %v108, %v117
  %v126 = vsub.f32 %v109, %v118
  %v127 = vsub.f32 %v110, %v119
  %v128 = vsub.f32 %v111, %v120
  %v129 = vsub.f32 %v112, %v121
  %v130 = vsub.f32 %v113, %v122
  %v131 = vsub.f32 %v114, %v123
  %v132 = vsub.f32 %v115, %v124
  %s133 = scalar_lea.vmem %s42, 384
  %v134 = vld [vmem:[%s133] sm:$0xff]
  %v135 = vld [vmem:[%s133 + $0x8] sm:$0xff]
  %v136 = vld [vmem:[%s133 + $0x10] sm:$0xff]
  %v137 = vld [vmem:[%s133 + $0x18] sm:$0xff]
  %v138 = vld [vmem:[%s133 + $0x20] sm:$0xff]
  %v139 = vld [vmem:[%s133 + $0x28] sm:$0xff]
  %v140 = vld [vmem:[%s133 + $0x30] sm:$0xff]
  %v141 = vld [vmem:[%s133 + $0x38] sm:$0xff]
  %v142 = vsub.f32 %v134, %v57
  %v143 = vsub.f32 %v135, %v58
  %v144 = vsub.f32 %v136, %v59
  %v145 = vsub.f32 %v137, %v60
  %v146 = vsub.f32 %v138, %v61
  %v147 = vsub.f32 %v139, %v62
  %v148 = vsub.f32 %v140, %v63
  %v149 = vsub.f32 %v141, %v64
  %s150 = scalar_lea.vmem %s42, 448
  %v151 = vld [vmem:[%s150] sm:$0xff]
  %v152 = vld [vmem:[%s150 + $0x8] sm:$0xff]
  %v153 = vld [vmem:[%s150 + $0x10] sm:$0xff]
  %v154 = vld [vmem:[%s150 + $0x18] sm:$0xff]
  %v155 = vld [vmem:[%s150 + $0x20] sm:$0xff]
  %v156 = vld [vmem:[%s150 + $0x28] sm:$0xff]
  %v157 = vld [vmem:[%s150 + $0x30] sm:$0xff]
  %v158 = vld [vmem:[%s150 + $0x38] sm:$0xff]
  %v159 = vsub.f32 %v151, %v82
  %v160 = vsub.f32 %v152, %v83
  %v161 = vsub.f32 %v153, %v84
  %v162 = vsub.f32 %v154, %v85
  %v163 = vsub.f32 %v155, %v86
  %v164 = vsub.f32 %v156, %v87
  %v165 = vsub.f32 %v157, %v88
  %v166 = vsub.f32 %v158, %v89
  %s167 = scalar_lea.vmem %s42, 512
  %v168 = vld [vmem:[%s167] sm:$0xff]
  %v169 = vld [vmem:[%s167 + $0x8] sm:$0xff]
  %v170 = vld [vmem:[%s167 + $0x10] sm:$0xff]
  %v171 = vld [vmem:[%s167 + $0x18] sm:$0xff]
  %v172 = vld [vmem:[%s167 + $0x20] sm:$0xff]
  %v173 = vld [vmem:[%s167 + $0x28] sm:$0xff]
  %v174 = vld [vmem:[%s167 + $0x30] sm:$0xff]
  %v175 = vld [vmem:[%s167 + $0x38] sm:$0xff]
  %v176 = vsub.f32 %v168, %v108
  %v177 = vsub.f32 %v169, %v109
  %v178 = vsub.f32 %v170, %v110
  %v179 = vsub.f32 %v171, %v111
  %v180 = vsub.f32 %v172, %v112
  %v181 = vsub.f32 %v173, %v113
  %v182 = vsub.f32 %v174, %v114
  %v183 = vsub.f32 %v175, %v115
  %s184 = scalar_lea.vmem %s42, 576
  %v185 = vld [vmem:[%s184] sm:$0xff]
  %v186 = vld [vmem:[%s184 + $0x8] sm:$0xff]
  %v187 = vld [vmem:[%s184 + $0x10] sm:$0xff]
  %v188 = vld [vmem:[%s184 + $0x18] sm:$0xff]
  %v189 = vld [vmem:[%s184 + $0x20] sm:$0xff]
  %v190 = vld [vmem:[%s184 + $0x28] sm:$0xff]
  %v191 = vld [vmem:[%s184 + $0x30] sm:$0xff]
  %v192 = vld [vmem:[%s184 + $0x38] sm:$0xff]
  %v193 = vsub.f32 %v185, %v134
  %v194 = vsub.f32 %v186, %v135
  %v195 = vsub.f32 %v187, %v136
  %v196 = vsub.f32 %v188, %v137
  %v197 = vsub.f32 %v189, %v138
  %v198 = vsub.f32 %v190, %v139
  %v199 = vsub.f32 %v191, %v140
  %v200 = vsub.f32 %v192, %v141
  %s201 = scalar_lea.vmem %s42, 640
  %v202 = vld [vmem:[%s201] sm:$0xff]
  %v203 = vld [vmem:[%s201 + $0x8] sm:$0xff]
  %v204 = vld [vmem:[%s201 + $0x10] sm:$0xff]
  %v205 = vld [vmem:[%s201 + $0x18] sm:$0xff]
  %v206 = vld [vmem:[%s201 + $0x20] sm:$0xff]
  %v207 = vld [vmem:[%s201 + $0x28] sm:$0xff]
  %v208 = vld [vmem:[%s201 + $0x30] sm:$0xff]
  %v209 = vld [vmem:[%s201 + $0x38] sm:$0xff]
  %v210 = vsub.f32 %v202, %v151
  %v211 = vsub.f32 %v203, %v152
  %v212 = vsub.f32 %v204, %v153
  %v213 = vsub.f32 %v205, %v154
  %v214 = vsub.f32 %v206, %v155
  %v215 = vsub.f32 %v207, %v156
  %v216 = vsub.f32 %v208, %v157
  %v217 = vsub.f32 %v209, %v158
  %s218 = scalar_lea.vmem %s42, 704
  %v219 = vld [vmem:[%s218] sm:$0xff]
  %v220 = vld [vmem:[%s218 + $0x8] sm:$0xff]
  %v221 = vld [vmem:[%s218 + $0x10] sm:$0xff]
  %v222 = vld [vmem:[%s218 + $0x18] sm:$0xff]
  %v223 = vld [vmem:[%s218 + $0x20] sm:$0xff]
  %v224 = vld [vmem:[%s218 + $0x28] sm:$0xff]
  %v225 = vld [vmem:[%s218 + $0x30] sm:$0xff]
  %v226 = vld [vmem:[%s218 + $0x38] sm:$0xff]
  %v227 = vsub.f32 %v219, %v168
  %v228 = vsub.f32 %v220, %v169
  %v229 = vsub.f32 %v221, %v170
  %v230 = vsub.f32 %v222, %v171
  %v231 = vsub.f32 %v223, %v172
  %v232 = vsub.f32 %v224, %v173
  %v233 = vsub.f32 %v225, %v174
  %v234 = vsub.f32 %v226, %v175
  %v235 = vmul.f32 %v99, %v176
  %v236 = vmul.f32 %v100, %v177
  %v237 = vmul.f32 %v101, %v178
  %v238 = vmul.f32 %v102, %v179
  %v239 = vmul.f32 %v103, %v180
  %v240 = vmul.f32 %v104, %v181
  %v241 = vmul.f32 %v105, %v182
  %v242 = vmul.f32 %v106, %v183
  %v243 = vmul.f32 %v125, %v159
  %v244 = vmul.f32 %v126, %v160
  %v245 = vmul.f32 %v127, %v161
  %v246 = vmul.f32 %v128, %v162
  %v247 = vmul.f32 %v129, %v163
  %v248 = vmul.f32 %v130, %v164
  %v249 = vmul.f32 %v131, %v165
  %v250 = vmul.f32 %v132, %v166
  %v251 = vsub.f32 %v235, %v243
  %v252 = vsub.f32 %v236, %v244
  %v253 = vsub.f32 %v237, %v245
  %v254 = vsub.f32 %v238, %v246
  %v255 = vsub.f32 %v239, %v247
  %v256 = vsub.f32 %v240, %v248
  %v257 = vsub.f32 %v241, %v249
  %v258 = vsub.f32 %v242, %v250
  %v259 = vmul.f32 %v125, %v142
  %v260 = vmul.f32 %v126, %v143
  %v261 = vmul.f32 %v127, %v144
  %v262 = vmul.f32 %v128, %v145
  %v263 = vmul.f32 %v129, %v146
  %v264 = vmul.f32 %v130, %v147
  %v265 = vmul.f32 %v131, %v148
  %v266 = vmul.f32 %v132, %v149
  %v267 = vmul.f32 %v73, %v176
  %v268 = vmul.f32 %v74, %v177
  %v269 = vmul.f32 %v75, %v178
  %v270 = vmul.f32 %v76, %v179
  %v271 = vmul.f32 %v77, %v180
  %v272 = vmul.f32 %v78, %v181
  %v273 = vmul.f32 %v79, %v182
  %v274 = vmul.f32 %v80, %v183
  %v275 = vsub.f32 %v259, %v267
  %v276 = vsub.f32 %v260, %v268
  %v277 = vsub.f32 %v261, %v269
  %v278 = vsub.f32 %v262, %v270
  %v279 = vsub.f32 %v263, %v271
  %v280 = vsub.f32 %v264, %v272
  %v281 = vsub.f32 %v265, %v273
  %v282 = vsub.f32 %v266, %v274
  %v283 = vmul.f32 %v73, %v159
  %v284 = vmul.f32 %v74, %v160
  %v285 = vmul.f32 %v75, %v161
  %v286 = vmul.f32 %v76, %v162
  %v287 = vmul.f32 %v77, %v163
  %v288 = vmul.f32 %v78, %v164
  %v289 = vmul.f32 %v79, %v165
  %v290 = vmul.f32 %v80, %v166
  %v291 = vmul.f32 %v99, %v142
  %v292 = vmul.f32 %v100, %v143
  %v293 = vmul.f32 %v101, %v144
  %v294 = vmul.f32 %v102, %v145
  %v295 = vmul.f32 %v103, %v146
  %v296 = vmul.f32 %v104, %v147
  %v297 = vmul.f32 %v105, %v148
  %v298 = vmul.f32 %v106, %v149
  %v299 = vsub.f32 %v283, %v291
  %v300 = vsub.f32 %v284, %v292
  %v301 = vsub.f32 %v285, %v293
  %v302 = vsub.f32 %v286, %v294
  %v303 = vsub.f32 %v287, %v295
  %v304 = vsub.f32 %v288, %v296
  %v305 = vsub.f32 %v289, %v297
  %v306 = vsub.f32 %v290, %v298
  %v307 = vmul.f32 %v159, %v227
  %v308 = vmul.f32 %v160, %v228
  %v309 = vmul.f32 %v161, %v229
  %v310 = vmul.f32 %v162, %v230
  %v311 = vmul.f32 %v163, %v231
  %v312 = vmul.f32 %v164, %v232
  %v313 = vmul.f32 %v165, %v233
  %v314 = vmul.f32 %v166, %v234
  %v315 = vmul.f32 %v176, %v210
  %v316 = vmul.f32 %v177, %v211
  %v317 = vmul.f32 %v178, %v212
  %v318 = vmul.f32 %v179, %v213
  %v319 = vmul.f32 %v180, %v214
  %v320 = vmul.f32 %v181, %v215
  %v321 = vmul.f32 %v182, %v216
  %v322 = vmul.f32 %v183, %v217
  %v323 = vsub.f32 %v307, %v315
  %v324 = vsub.f32 %v308, %v316
  %v325 = vsub.f32 %v309, %v317
  %v326 = vsub.f32 %v310, %v318
  %v327 = vsub.f32 %v311, %v319
  %v328 = vsub.f32 %v312, %v320
  %v329 = vsub.f32 %v313, %v321
  %v330 = vsub.f32 %v314, %v322
  %v331 = vmul.f32 %v176, %v193
  %v332 = vmul.f32 %v177, %v194
  %v333 = vmul.f32 %v178, %v195
  %v334 = vmul.f32 %v179, %v196
  %v335 = vmul.f32 %v180, %v197
  %v336 = vmul.f32 %v181, %v198
  %v337 = vmul.f32 %v182, %v199
  %v338 = vmul.f32 %v183, %v200
  %v339 = vmul.f32 %v142, %v227
  %v340 = vmul.f32 %v143, %v228
  %v341 = vmul.f32 %v144, %v229
  %v342 = vmul.f32 %v145, %v230
  %v343 = vmul.f32 %v146, %v231
  %v344 = vmul.f32 %v147, %v232
  %v345 = vmul.f32 %v148, %v233
  %v346 = vmul.f32 %v149, %v234
  %v347 = vsub.f32 %v331, %v339
  %v348 = vsub.f32 %v332, %v340
  %v349 = vsub.f32 %v333, %v341
  %v350 = vsub.f32 %v334, %v342
  %v351 = vsub.f32 %v335, %v343
  %v352 = vsub.f32 %v336, %v344
  %v353 = vsub.f32 %v337, %v345
  %v354 = vsub.f32 %v338, %v346
  %v355 = vmul.f32 %v142, %v210
  %v356 = vmul.f32 %v143, %v211
  %v357 = vmul.f32 %v144, %v212
  %v358 = vmul.f32 %v145, %v213
  %v359 = vmul.f32 %v146, %v214
  %v360 = vmul.f32 %v147, %v215
  %v361 = vmul.f32 %v148, %v216
  %v362 = vmul.f32 %v149, %v217
  %v363 = vmul.f32 %v159, %v193
  %v364 = vmul.f32 %v160, %v194
  %v365 = vmul.f32 %v161, %v195
  %v366 = vmul.f32 %v162, %v196
  %v367 = vmul.f32 %v163, %v197
  %v368 = vmul.f32 %v164, %v198
  %v369 = vmul.f32 %v165, %v199
  %v370 = vmul.f32 %v166, %v200
  %v371 = vsub.f32 %v355, %v363
  %v372 = vsub.f32 %v356, %v364
  %v373 = vsub.f32 %v357, %v365
  %v374 = vsub.f32 %v358, %v366
  %v375 = vsub.f32 %v359, %v367
  %v376 = vsub.f32 %v360, %v368
  %v377 = vsub.f32 %v361, %v369
  %v378 = vsub.f32 %v362, %v370
  %v379 = vmul.f32 %v251, %v251
  %v380 = vmul.f32 %v252, %v252
  %v381 = vmul.f32 %v253, %v253
  %v382 = vmul.f32 %v254, %v254
  %v383 = vmul.f32 %v255, %v255
  %v384 = vmul.f32 %v256, %v256
  %v385 = vmul.f32 %v257, %v257
  %v386 = vmul.f32 %v258, %v258
  %v387 = vmul.f32 %v275, %v275
  %v388 = vmul.f32 %v276, %v276
  %v389 = vmul.f32 %v277, %v277
  %v390 = vmul.f32 %v278, %v278
  %v391 = vmul.f32 %v279, %v279
  %v392 = vmul.f32 %v280, %v280
  %v393 = vmul.f32 %v281, %v281
  %v394 = vmul.f32 %v282, %v282
  %v395 = vadd.f32 %v379, %v387
  %v396 = vadd.f32 %v380, %v388
  %v397 = vadd.f32 %v381, %v389
  %v398 = vadd.f32 %v382, %v390
  %v399 = vadd.f32 %v383, %v391
  %v400 = vadd.f32 %v384, %v392
  %v401 = vadd.f32 %v385, %v393
  %v402 = vadd.f32 %v386, %v394
  %v403 = vmul.f32 %v299, %v299
  %v404 = vmul.f32 %v300, %v300
  %v405 = vmul.f32 %v301, %v301
  %v406 = vmul.f32 %v302, %v302
  %v407 = vmul.f32 %v303, %v303
  %v408 = vmul.f32 %v304, %v304
  %v409 = vmul.f32 %v305, %v305
  %v410 = vmul.f32 %v306, %v306
  %v411 = vadd.f32 %v395, %v403
  %v412 = vadd.f32 %v396, %v404
  %v413 = vadd.f32 %v397, %v405
  %v414 = vadd.f32 %v398, %v406
  %v415 = vadd.f32 %v399, %v407
  %v416 = vadd.f32 %v400, %v408
  %v417 = vadd.f32 %v401, %v409
  %v418 = vadd.f32 %v402, %v410
  %v419 = vmax.f32 %v411, 1e-30
  %v420 = vmax.f32 %v412, 1e-30
  %v421 = vmax.f32 %v413, 1e-30
  %v422 = vmax.f32 %v414, 1e-30
  %v423 = vmax.f32 %v415, 1e-30
  %v424 = vmax.f32 %v416, 1e-30
  %v425 = vmax.f32 %v417, 1e-30
  %v426 = vmax.f32 %v418, 1e-30
  %v427 = vrsqrt.pop %v419
  %v428 = vmul.f32 %v427, %v419
  %v429 = vmul.f32 %v428, %v427
  %v430 = vmul.f32 0.5, %v429
  %v431 = vsub.f32 1.5, %v430
  %v432 = vmul.f32 %v427, %v431
  %vm433 = vweird.f32 %v419
  %vm434 = vweird.f32 %v427
  %vm435 = vmor %vm433, %vm434
  %v436 = vsel %vm435, %v427, %v432
  %v437 = vrsqrt.pop %v420
  %v438 = vmul.f32 %v437, %v420
  %v439 = vmul.f32 %v438, %v437
  %v440 = vmul.f32 0.5, %v439
  %v441 = vsub.f32 1.5, %v440
  %v442 = vmul.f32 %v437, %v441
  %vm443 = vweird.f32 %v420
  %vm444 = vweird.f32 %v437
  %vm445 = vmor %vm443, %vm444
  %v446 = vsel %vm445, %v437, %v442
  %v447 = vrsqrt.pop %v421
  %v448 = vmul.f32 %v447, %v421
  %v449 = vmul.f32 %v448, %v447
  %v450 = vmul.f32 0.5, %v449
  %v451 = vsub.f32 1.5, %v450
  %v452 = vmul.f32 %v447, %v451
  %vm453 = vweird.f32 %v421
  %vm454 = vweird.f32 %v447
  %vm455 = vmor %vm453, %vm454
  %v456 = vsel %vm455, %v447, %v452
  %v457 = vrsqrt.pop %v422
  %v458 = vmul.f32 %v457, %v422
  %v459 = vmul.f32 %v458, %v457
  %v460 = vmul.f32 0.5, %v459
  %v461 = vsub.f32 1.5, %v460
  %v462 = vmul.f32 %v457, %v461
  %vm463 = vweird.f32 %v422
  %vm464 = vweird.f32 %v457
  %vm465 = vmor %vm463, %vm464
  %v466 = vsel %vm465, %v457, %v462
  %v467 = vrsqrt.pop %v423
  %v468 = vmul.f32 %v467, %v423
  %v469 = vmul.f32 %v468, %v467
  %v470 = vmul.f32 0.5, %v469
  %v471 = vsub.f32 1.5, %v470
  %v472 = vmul.f32 %v467, %v471
  %vm473 = vweird.f32 %v423
  %vm474 = vweird.f32 %v467
  %vm475 = vmor %vm473, %vm474
  %v476 = vsel %vm475, %v467, %v472
  %v477 = vrsqrt.pop %v424
  %v478 = vmul.f32 %v477, %v424
  %v479 = vmul.f32 %v478, %v477
  %v480 = vmul.f32 0.5, %v479
  %v481 = vsub.f32 1.5, %v480
  %v482 = vmul.f32 %v477, %v481
  %vm483 = vweird.f32 %v424
  %vm484 = vweird.f32 %v477
  %vm485 = vmor %vm483, %vm484
  %v486 = vsel %vm485, %v477, %v482
  %v487 = vrsqrt.pop %v425
  %v488 = vmul.f32 %v487, %v425
  %v489 = vmul.f32 %v488, %v487
  %v490 = vmul.f32 0.5, %v489
  %v491 = vsub.f32 1.5, %v490
  %v492 = vmul.f32 %v487, %v491
  %vm493 = vweird.f32 %v425
  %vm494 = vweird.f32 %v487
  %vm495 = vmor %vm493, %vm494
  %v496 = vsel %vm495, %v487, %v492
  %v497 = vrsqrt.pop %v426
  %v498 = vmul.f32 %v497, %v426
  %v499 = vmul.f32 %v498, %v497
  %v500 = vmul.f32 0.5, %v499
  %v501 = vsub.f32 1.5, %v500
  %v502 = vmul.f32 %v497, %v501
  %vm503 = vweird.f32 %v426
  %vm504 = vweird.f32 %v497
  %vm505 = vmor %vm503, %vm504
  %v506 = vsel %vm505, %v497, %v502
  %v507 = vmul.f32 %v323, %v323
  %v508 = vmul.f32 %v324, %v324
  %v509 = vmul.f32 %v325, %v325
  %v510 = vmul.f32 %v326, %v326
  %v511 = vmul.f32 %v327, %v327
  %v512 = vmul.f32 %v328, %v328
  %v513 = vmul.f32 %v329, %v329
  %v514 = vmul.f32 %v330, %v330
  %v515 = vmul.f32 %v347, %v347
  %v516 = vmul.f32 %v348, %v348
  %v517 = vmul.f32 %v349, %v349
  %v518 = vmul.f32 %v350, %v350
  %v519 = vmul.f32 %v351, %v351
  %v520 = vmul.f32 %v352, %v352
  %v521 = vmul.f32 %v353, %v353
  %v522 = vmul.f32 %v354, %v354
  %v523 = vadd.f32 %v507, %v515
  %v524 = vadd.f32 %v508, %v516
  %v525 = vadd.f32 %v509, %v517
  %v526 = vadd.f32 %v510, %v518
  %v527 = vadd.f32 %v511, %v519
  %v528 = vadd.f32 %v512, %v520
  %v529 = vadd.f32 %v513, %v521
  %v530 = vadd.f32 %v514, %v522
  %v531 = vmul.f32 %v371, %v371
  %v532 = vmul.f32 %v372, %v372
  %v533 = vmul.f32 %v373, %v373
  %v534 = vmul.f32 %v374, %v374
  %v535 = vmul.f32 %v375, %v375
  %v536 = vmul.f32 %v376, %v376
  %v537 = vmul.f32 %v377, %v377
  %v538 = vmul.f32 %v378, %v378
  %v539 = vadd.f32 %v523, %v531
  %v540 = vadd.f32 %v524, %v532
  %v541 = vadd.f32 %v525, %v533
  %v542 = vadd.f32 %v526, %v534
  %v543 = vadd.f32 %v527, %v535
  %v544 = vadd.f32 %v528, %v536
  %v545 = vadd.f32 %v529, %v537
  %v546 = vadd.f32 %v530, %v538
  %v547 = vmax.f32 %v539, 1e-30
  %v548 = vmax.f32 %v540, 1e-30
  %v549 = vmax.f32 %v541, 1e-30
  %v550 = vmax.f32 %v542, 1e-30
  %v551 = vmax.f32 %v543, 1e-30
  %v552 = vmax.f32 %v544, 1e-30
  %v553 = vmax.f32 %v545, 1e-30
  %v554 = vmax.f32 %v546, 1e-30
  %v555 = vrsqrt.pop %v547
  %v556 = vmul.f32 %v555, %v547
  %v557 = vmul.f32 %v556, %v555
  %v558 = vmul.f32 0.5, %v557
  %v559 = vsub.f32 1.5, %v558
  %v560 = vmul.f32 %v555, %v559
  %vm561 = vweird.f32 %v547
  %vm562 = vweird.f32 %v555
  %vm563 = vmor %vm561, %vm562
  %v564 = vsel %vm563, %v555, %v560
  %v565 = vrsqrt.pop %v548
  %v566 = vmul.f32 %v565, %v548
  %v567 = vmul.f32 %v566, %v565
  %v568 = vmul.f32 0.5, %v567
  %v569 = vsub.f32 1.5, %v568
  %v570 = vmul.f32 %v565, %v569
  %vm571 = vweird.f32 %v548
  %vm572 = vweird.f32 %v565
  %vm573 = vmor %vm571, %vm572
  %v574 = vsel %vm573, %v565, %v570
  %v575 = vrsqrt.pop %v549
  %v576 = vmul.f32 %v575, %v549
  %v577 = vmul.f32 %v576, %v575
  %v578 = vmul.f32 0.5, %v577
  %v579 = vsub.f32 1.5, %v578
  %v580 = vmul.f32 %v575, %v579
  %vm581 = vweird.f32 %v549
  %vm582 = vweird.f32 %v575
  %vm583 = vmor %vm581, %vm582
  %v584 = vsel %vm583, %v575, %v580
  %v585 = vrsqrt.pop %v550
  %v586 = vmul.f32 %v585, %v550
  %v587 = vmul.f32 %v586, %v585
  %v588 = vmul.f32 0.5, %v587
  %v589 = vsub.f32 1.5, %v588
  %v590 = vmul.f32 %v585, %v589
  %vm591 = vweird.f32 %v550
  %vm592 = vweird.f32 %v585
  %vm593 = vmor %vm591, %vm592
  %v594 = vsel %vm593, %v585, %v590
  %v595 = vrsqrt.pop %v551
  %v596 = vmul.f32 %v595, %v551
  %v597 = vmul.f32 %v596, %v595
  %v598 = vmul.f32 0.5, %v597
  %v599 = vsub.f32 1.5, %v598
  %v600 = vmul.f32 %v595, %v599
  %vm601 = vweird.f32 %v551
  %vm602 = vweird.f32 %v595
  %vm603 = vmor %vm601, %vm602
  %v604 = vsel %vm603, %v595, %v600
  %v605 = vrsqrt.pop %v552
  %v606 = vmul.f32 %v605, %v552
  %v607 = vmul.f32 %v606, %v605
  %v608 = vmul.f32 0.5, %v607
  %v609 = vsub.f32 1.5, %v608
  %v610 = vmul.f32 %v605, %v609
  %vm611 = vweird.f32 %v552
  %vm612 = vweird.f32 %v605
  %vm613 = vmor %vm611, %vm612
  %v614 = vsel %vm613, %v605, %v610
  %v615 = vrsqrt.pop %v553
  %v616 = vmul.f32 %v615, %v553
  %v617 = vmul.f32 %v616, %v615
  %v618 = vmul.f32 0.5, %v617
  %v619 = vsub.f32 1.5, %v618
  %v620 = vmul.f32 %v615, %v619
  %vm621 = vweird.f32 %v553
  %vm622 = vweird.f32 %v615
  %vm623 = vmor %vm621, %vm622
  %v624 = vsel %vm623, %v615, %v620
  %v625 = vrsqrt.pop %v554
  %v626 = vmul.f32 %v625, %v554
  %v627 = vmul.f32 %v626, %v625
  %v628 = vmul.f32 0.5, %v627
  %v629 = vsub.f32 1.5, %v628
  %v630 = vmul.f32 %v625, %v629
  %vm631 = vweird.f32 %v554
  %vm632 = vweird.f32 %v625
  %vm633 = vmor %vm631, %vm632
  %v634 = vsel %vm633, %v625, %v630
  %v635 = vmul.f32 %v142, %v142
  %v636 = vmul.f32 %v143, %v143
  %v637 = vmul.f32 %v144, %v144
  %v638 = vmul.f32 %v145, %v145
  %v639 = vmul.f32 %v146, %v146
  %v640 = vmul.f32 %v147, %v147
  %v641 = vmul.f32 %v148, %v148
  %v642 = vmul.f32 %v149, %v149
  %v643 = vmul.f32 %v159, %v159
  %v644 = vmul.f32 %v160, %v160
  %v645 = vmul.f32 %v161, %v161
  %v646 = vmul.f32 %v162, %v162
  %v647 = vmul.f32 %v163, %v163
  %v648 = vmul.f32 %v164, %v164
  %v649 = vmul.f32 %v165, %v165
  %v650 = vmul.f32 %v166, %v166
  %v651 = vadd.f32 %v635, %v643
  %v652 = vadd.f32 %v636, %v644
  %v653 = vadd.f32 %v637, %v645
  %v654 = vadd.f32 %v638, %v646
  %v655 = vadd.f32 %v639, %v647
  %v656 = vadd.f32 %v640, %v648
  %v657 = vadd.f32 %v641, %v649
  %v658 = vadd.f32 %v642, %v650
  %v659 = vmul.f32 %v176, %v176
  %v660 = vmul.f32 %v177, %v177
  %v661 = vmul.f32 %v178, %v178
  %v662 = vmul.f32 %v179, %v179
  %v663 = vmul.f32 %v180, %v180
  %v664 = vmul.f32 %v181, %v181
  %v665 = vmul.f32 %v182, %v182
  %v666 = vmul.f32 %v183, %v183
  %v667 = vadd.f32 %v651, %v659
  %v668 = vadd.f32 %v652, %v660
  %v669 = vadd.f32 %v653, %v661
  %v670 = vadd.f32 %v654, %v662
  %v671 = vadd.f32 %v655, %v663
  %v672 = vadd.f32 %v656, %v664
  %v673 = vadd.f32 %v657, %v665
  %v674 = vadd.f32 %v658, %v666
  %v675 = vmax.f32 %v667, 1e-30
  %v676 = vmax.f32 %v668, 1e-30
  %v677 = vmax.f32 %v669, 1e-30
  %v678 = vmax.f32 %v670, 1e-30
  %v679 = vmax.f32 %v671, 1e-30
  %v680 = vmax.f32 %v672, 1e-30
  %v681 = vmax.f32 %v673, 1e-30
  %v682 = vmax.f32 %v674, 1e-30
  %v683 = vrsqrt.pop %v675
  %v684 = vmul.f32 %v683, %v675
  %v685 = vmul.f32 %v684, %v683
  %v686 = vmul.f32 0.5, %v685
  %v687 = vsub.f32 1.5, %v686
  %v688 = vmul.f32 %v683, %v687
  %vm689 = vweird.f32 %v675
  %vm690 = vweird.f32 %v683
  %vm691 = vmor %vm689, %vm690
  %v692 = vsel %vm691, %v683, %v688
  %v693 = vrsqrt.pop %v676
  %v694 = vmul.f32 %v693, %v676
  %v695 = vmul.f32 %v694, %v693
  %v696 = vmul.f32 0.5, %v695
  %v697 = vsub.f32 1.5, %v696
  %v698 = vmul.f32 %v693, %v697
  %vm699 = vweird.f32 %v676
  %vm700 = vweird.f32 %v693
  %vm701 = vmor %vm699, %vm700
  %v702 = vsel %vm701, %v693, %v698
  %v703 = vrsqrt.pop %v677
  %v704 = vmul.f32 %v703, %v677
  %v705 = vmul.f32 %v704, %v703
  %v706 = vmul.f32 0.5, %v705
  %v707 = vsub.f32 1.5, %v706
  %v708 = vmul.f32 %v703, %v707
  %vm709 = vweird.f32 %v677
  %vm710 = vweird.f32 %v703
  %vm711 = vmor %vm709, %vm710
  %v712 = vsel %vm711, %v703, %v708
  %v713 = vrsqrt.pop %v678
  %v714 = vmul.f32 %v713, %v678
  %v715 = vmul.f32 %v714, %v713
  %v716 = vmul.f32 0.5, %v715
  %v717 = vsub.f32 1.5, %v716
  %v718 = vmul.f32 %v713, %v717
  %vm719 = vweird.f32 %v678
  %vm720 = vweird.f32 %v713
  %vm721 = vmor %vm719, %vm720
  %v722 = vsel %vm721, %v713, %v718
  %v723 = vrsqrt.pop %v679
  %v724 = vmul.f32 %v723, %v679
  %v725 = vmul.f32 %v724, %v723
  %v726 = vmul.f32 0.5, %v725
  %v727 = vsub.f32 1.5, %v726
  %v728 = vmul.f32 %v723, %v727
  %vm729 = vweird.f32 %v679
  %vm730 = vweird.f32 %v723
  %vm731 = vmor %vm729, %vm730
  %v732 = vsel %vm731, %v723, %v728
  %v733 = vrsqrt.pop %v680
  %v734 = vmul.f32 %v733, %v680
  %v735 = vmul.f32 %v734, %v733
  %v736 = vmul.f32 0.5, %v735
  %v737 = vsub.f32 1.5, %v736
  %v738 = vmul.f32 %v733, %v737
  %vm739 = vweird.f32 %v680
  %vm740 = vweird.f32 %v733
  %vm741 = vmor %vm739, %vm740
  %v742 = vsel %vm741, %v733, %v738
  %v743 = vrsqrt.pop %v681
  %v744 = vmul.f32 %v743, %v681
  %v745 = vmul.f32 %v744, %v743
  %v746 = vmul.f32 0.5, %v745
  %v747 = vsub.f32 1.5, %v746
  %v748 = vmul.f32 %v743, %v747
  %vm749 = vweird.f32 %v681
  %vm750 = vweird.f32 %v743
  %vm751 = vmor %vm749, %vm750
  %v752 = vsel %vm751, %v743, %v748
  %v753 = vrsqrt.pop %v682
  %v754 = vmul.f32 %v753, %v682
  %v755 = vmul.f32 %v754, %v753
  %v756 = vmul.f32 0.5, %v755
  %v757 = vsub.f32 1.5, %v756
  %v758 = vmul.f32 %v753, %v757
  %vm759 = vweird.f32 %v682
  %vm760 = vweird.f32 %v753
  %vm761 = vmor %vm759, %vm760
  %v762 = vsel %vm761, %v753, %v758
  %v763 = vmul.f32 %v251, %v436
  %v764 = vmul.f32 %v252, %v446
  %v765 = vmul.f32 %v253, %v456
  %v766 = vmul.f32 %v254, %v466
  %v767 = vmul.f32 %v255, %v476
  %v768 = vmul.f32 %v256, %v486
  %v769 = vmul.f32 %v257, %v496
  %v770 = vmul.f32 %v258, %v506
  %v771 = vmul.f32 %v275, %v436
  %v772 = vmul.f32 %v276, %v446
  %v773 = vmul.f32 %v277, %v456
  %v774 = vmul.f32 %v278, %v466
  %v775 = vmul.f32 %v279, %v476
  %v776 = vmul.f32 %v280, %v486
  %v777 = vmul.f32 %v281, %v496
  %v778 = vmul.f32 %v282, %v506
  %v779 = vmul.f32 %v299, %v436
  %v780 = vmul.f32 %v300, %v446
  %v781 = vmul.f32 %v301, %v456
  %v782 = vmul.f32 %v302, %v466
  %v783 = vmul.f32 %v303, %v476
  %v784 = vmul.f32 %v304, %v486
  %v785 = vmul.f32 %v305, %v496
  %v786 = vmul.f32 %v306, %v506
  %v787 = vmul.f32 %v323, %v564
  %v788 = vmul.f32 %v324, %v574
  %v789 = vmul.f32 %v325, %v584
  %v790 = vmul.f32 %v326, %v594
  %v791 = vmul.f32 %v327, %v604
  %v792 = vmul.f32 %v328, %v614
  %v793 = vmul.f32 %v329, %v624
  %v794 = vmul.f32 %v330, %v634
  %v795 = vmul.f32 %v347, %v564
  %v796 = vmul.f32 %v348, %v574
  %v797 = vmul.f32 %v349, %v584
  %v798 = vmul.f32 %v350, %v594
  %v799 = vmul.f32 %v351, %v604
  %v800 = vmul.f32 %v352, %v614
  %v801 = vmul.f32 %v353, %v624
  %v802 = vmul.f32 %v354, %v634
  %v803 = vmul.f32 %v371, %v564
  %v804 = vmul.f32 %v372, %v574
  %v805 = vmul.f32 %v373, %v584
  %v806 = vmul.f32 %v374, %v594
  %v807 = vmul.f32 %v375, %v604
  %v808 = vmul.f32 %v376, %v614
  %v809 = vmul.f32 %v377, %v624
  %v810 = vmul.f32 %v378, %v634
  %v811 = vmul.f32 %v142, %v692
  %v812 = vmul.f32 %v143, %v702
  %v813 = vmul.f32 %v144, %v712
  %v814 = vmul.f32 %v145, %v722
  %v815 = vmul.f32 %v146, %v732
  %v816 = vmul.f32 %v147, %v742
  %v817 = vmul.f32 %v148, %v752
  %v818 = vmul.f32 %v149, %v762
  %v819 = vmul.f32 %v159, %v692
  %v820 = vmul.f32 %v160, %v702
  %v821 = vmul.f32 %v161, %v712
  %v822 = vmul.f32 %v162, %v722
  %v823 = vmul.f32 %v163, %v732
  %v824 = vmul.f32 %v164, %v742
  %v825 = vmul.f32 %v165, %v752
  %v826 = vmul.f32 %v166, %v762
  %v827 = vmul.f32 %v176, %v692
  %v828 = vmul.f32 %v177, %v702
  %v829 = vmul.f32 %v178, %v712
  %v830 = vmul.f32 %v179, %v722
  %v831 = vmul.f32 %v180, %v732
  %v832 = vmul.f32 %v181, %v742
  %v833 = vmul.f32 %v182, %v752
  %v834 = vmul.f32 %v183, %v762
  %v835 = vmul.f32 %v763, %v787
  %v836 = vmul.f32 %v764, %v788
  %v837 = vmul.f32 %v765, %v789
  %v838 = vmul.f32 %v766, %v790
  %v839 = vmul.f32 %v767, %v791
  %v840 = vmul.f32 %v768, %v792
  %v841 = vmul.f32 %v769, %v793
  %v842 = vmul.f32 %v770, %v794
  %v843 = vmul.f32 %v771, %v795
  %v844 = vmul.f32 %v772, %v796
  %v845 = vmul.f32 %v773, %v797
  %v846 = vmul.f32 %v774, %v798
  %v847 = vmul.f32 %v775, %v799
  %v848 = vmul.f32 %v776, %v800
  %v849 = vmul.f32 %v777, %v801
  %v850 = vmul.f32 %v778, %v802
  %v851 = vadd.f32 %v835, %v843
  %v852 = vadd.f32 %v836, %v844
  %v853 = vadd.f32 %v837, %v845
  %v854 = vadd.f32 %v838, %v846
  %v855 = vadd.f32 %v839, %v847
  %v856 = vadd.f32 %v840, %v848
  %v857 = vadd.f32 %v841, %v849
  %v858 = vadd.f32 %v842, %v850
  %v859 = vmul.f32 %v779, %v803
  %v860 = vmul.f32 %v780, %v804
  %v861 = vmul.f32 %v781, %v805
  %v862 = vmul.f32 %v782, %v806
  %v863 = vmul.f32 %v783, %v807
  %v864 = vmul.f32 %v784, %v808
  %v865 = vmul.f32 %v785, %v809
  %v866 = vmul.f32 %v786, %v810
  %v867 = vadd.f32 %v851, %v859
  %v868 = vadd.f32 %v852, %v860
  %v869 = vadd.f32 %v853, %v861
  %v870 = vadd.f32 %v854, %v862
  %v871 = vadd.f32 %v855, %v863
  %v872 = vadd.f32 %v856, %v864
  %v873 = vadd.f32 %v857, %v865
  %v874 = vadd.f32 %v858, %v866
  %v875 = vmul.f32 %v771, %v827
  %v876 = vmul.f32 %v772, %v828
  %v877 = vmul.f32 %v773, %v829
  %v878 = vmul.f32 %v774, %v830
  %v879 = vmul.f32 %v775, %v831
  %v880 = vmul.f32 %v776, %v832
  %v881 = vmul.f32 %v777, %v833
  %v882 = vmul.f32 %v778, %v834
  %v883 = vmul.f32 %v779, %v819
  %v884 = vmul.f32 %v780, %v820
  %v885 = vmul.f32 %v781, %v821
  %v886 = vmul.f32 %v782, %v822
  %v887 = vmul.f32 %v783, %v823
  %v888 = vmul.f32 %v784, %v824
  %v889 = vmul.f32 %v785, %v825
  %v890 = vmul.f32 %v786, %v826
  %v891 = vsub.f32 %v875, %v883
  %v892 = vsub.f32 %v876, %v884
  %v893 = vsub.f32 %v877, %v885
  %v894 = vsub.f32 %v878, %v886
  %v895 = vsub.f32 %v879, %v887
  %v896 = vsub.f32 %v880, %v888
  %v897 = vsub.f32 %v881, %v889
  %v898 = vsub.f32 %v882, %v890
  %v899 = vmul.f32 %v891, %v787
  %v900 = vmul.f32 %v892, %v788
  %v901 = vmul.f32 %v893, %v789
  %v902 = vmul.f32 %v894, %v790
  %v903 = vmul.f32 %v895, %v791
  %v904 = vmul.f32 %v896, %v792
  %v905 = vmul.f32 %v897, %v793
  %v906 = vmul.f32 %v898, %v794
  %v907 = vmul.f32 %v779, %v811
  %v908 = vmul.f32 %v780, %v812
  %v909 = vmul.f32 %v781, %v813
  %v910 = vmul.f32 %v782, %v814
  %v911 = vmul.f32 %v783, %v815
  %v912 = vmul.f32 %v784, %v816
  %v913 = vmul.f32 %v785, %v817
  %v914 = vmul.f32 %v786, %v818
  %v915 = vmul.f32 %v763, %v827
  %v916 = vmul.f32 %v764, %v828
  %v917 = vmul.f32 %v765, %v829
  %v918 = vmul.f32 %v766, %v830
  %v919 = vmul.f32 %v767, %v831
  %v920 = vmul.f32 %v768, %v832
  %v921 = vmul.f32 %v769, %v833
  %v922 = vmul.f32 %v770, %v834
  %v923 = vsub.f32 %v907, %v915
  %v924 = vsub.f32 %v908, %v916
  %v925 = vsub.f32 %v909, %v917
  %v926 = vsub.f32 %v910, %v918
  %v927 = vsub.f32 %v911, %v919
  %v928 = vsub.f32 %v912, %v920
  %v929 = vsub.f32 %v913, %v921
  %v930 = vsub.f32 %v914, %v922
  %v931 = vmul.f32 %v923, %v795
  %v932 = vmul.f32 %v924, %v796
  %v933 = vmul.f32 %v925, %v797
  %v934 = vmul.f32 %v926, %v798
  %v935 = vmul.f32 %v927, %v799
  %v936 = vmul.f32 %v928, %v800
  %v937 = vmul.f32 %v929, %v801
  %v938 = vmul.f32 %v930, %v802
  %v939 = vadd.f32 %v899, %v931
  %v940 = vadd.f32 %v900, %v932
  %v941 = vadd.f32 %v901, %v933
  %v942 = vadd.f32 %v902, %v934
  %v943 = vadd.f32 %v903, %v935
  %v944 = vadd.f32 %v904, %v936
  %v945 = vadd.f32 %v905, %v937
  %v946 = vadd.f32 %v906, %v938
  %v947 = vmul.f32 %v763, %v819
  %v948 = vmul.f32 %v764, %v820
  %v949 = vmul.f32 %v765, %v821
  %v950 = vmul.f32 %v766, %v822
  %v951 = vmul.f32 %v767, %v823
  %v952 = vmul.f32 %v768, %v824
  %v953 = vmul.f32 %v769, %v825
  %v954 = vmul.f32 %v770, %v826
  %v955 = vmul.f32 %v771, %v811
  %v956 = vmul.f32 %v772, %v812
  %v957 = vmul.f32 %v773, %v813
  %v958 = vmul.f32 %v774, %v814
  %v959 = vmul.f32 %v775, %v815
  %v960 = vmul.f32 %v776, %v816
  %v961 = vmul.f32 %v777, %v817
  %v962 = vmul.f32 %v778, %v818
  %v963 = vsub.f32 %v947, %v955
  %v964 = vsub.f32 %v948, %v956
  %v965 = vsub.f32 %v949, %v957
  %v966 = vsub.f32 %v950, %v958
  %v967 = vsub.f32 %v951, %v959
  %v968 = vsub.f32 %v952, %v960
  %v969 = vsub.f32 %v953, %v961
  %v970 = vsub.f32 %v954, %v962
  %v971 = vmul.f32 %v963, %v803
  %v972 = vmul.f32 %v964, %v804
  %v973 = vmul.f32 %v965, %v805
  %v974 = vmul.f32 %v966, %v806
  %v975 = vmul.f32 %v967, %v807
  %v976 = vmul.f32 %v968, %v808
  %v977 = vmul.f32 %v969, %v809
  %v978 = vmul.f32 %v970, %v810
  %v979 = vadd.f32 %v939, %v971
  %v980 = vadd.f32 %v940, %v972
  %v981 = vadd.f32 %v941, %v973
  %v982 = vadd.f32 %v942, %v974
  %v983 = vadd.f32 %v943, %v975
  %v984 = vadd.f32 %v944, %v976
  %v985 = vadd.f32 %v945, %v977
  %v986 = vadd.f32 %v946, %v978
  %v987 = vmul.f32 %v867, %v867
  %v988 = vmul.f32 %v868, %v868
  %v989 = vmul.f32 %v869, %v869
  %v990 = vmul.f32 %v870, %v870
  %v991 = vmul.f32 %v871, %v871
  %v992 = vmul.f32 %v872, %v872
  %v993 = vmul.f32 %v873, %v873
  %v994 = vmul.f32 %v874, %v874
  %v995 = vmul.f32 %v979, %v979
  %v996 = vmul.f32 %v980, %v980
  %v997 = vmul.f32 %v981, %v981
  %v998 = vmul.f32 %v982, %v982
  %v999 = vmul.f32 %v983, %v983
  %v1000 = vmul.f32 %v984, %v984
  %v1001 = vmul.f32 %v985, %v985
  %v1002 = vmul.f32 %v986, %v986
  %v1003 = vadd.f32 %v987, %v995
  %v1004 = vadd.f32 %v988, %v996
  %v1005 = vadd.f32 %v989, %v997
  %v1006 = vadd.f32 %v990, %v998
  %v1007 = vadd.f32 %v991, %v999
  %v1008 = vadd.f32 %v992, %v1000
  %v1009 = vadd.f32 %v993, %v1001
  %v1010 = vadd.f32 %v994, %v1002
  %v1011 = vmax.f32 %v1003, 1e-30
  %v1012 = vmax.f32 %v1004, 1e-30
  %v1013 = vmax.f32 %v1005, 1e-30
  %v1014 = vmax.f32 %v1006, 1e-30
  %v1015 = vmax.f32 %v1007, 1e-30
  %v1016 = vmax.f32 %v1008, 1e-30
  %v1017 = vmax.f32 %v1009, 1e-30
  %v1018 = vmax.f32 %v1010, 1e-30
  %v1019 = vrsqrt.pop %v1011
  %v1020 = vmul.f32 %v1019, %v1011
  %v1021 = vmul.f32 %v1020, %v1019
  %v1022 = vmul.f32 0.5, %v1021
  %v1023 = vsub.f32 1.5, %v1022
  %v1024 = vmul.f32 %v1019, %v1023
  %vm1025 = vweird.f32 %v1011
  %vm1026 = vweird.f32 %v1019
  %vm1027 = vmor %vm1025, %vm1026
  %v1028 = vsel %vm1027, %v1019, %v1024
  %v1029 = vrsqrt.pop %v1012
  %v1030 = vmul.f32 %v1029, %v1012
  %v1031 = vmul.f32 %v1030, %v1029
  %v1032 = vmul.f32 0.5, %v1031
  %v1033 = vsub.f32 1.5, %v1032
  %v1034 = vmul.f32 %v1029, %v1033
  %vm1035 = vweird.f32 %v1012
  %vm1036 = vweird.f32 %v1029
  %vm1037 = vmor %vm1035, %vm1036
  %v1038 = vsel %vm1037, %v1029, %v1034
  %v1039 = vrsqrt.pop %v1013
  %v1040 = vmul.f32 %v1039, %v1013
  %v1041 = vmul.f32 %v1040, %v1039
  %v1042 = vmul.f32 0.5, %v1041
  %v1043 = vsub.f32 1.5, %v1042
  %v1044 = vmul.f32 %v1039, %v1043
  %vm1045 = vweird.f32 %v1013
  %vm1046 = vweird.f32 %v1039
  %vm1047 = vmor %vm1045, %vm1046
  %v1048 = vsel %vm1047, %v1039, %v1044
  %v1049 = vrsqrt.pop %v1014
  %v1050 = vmul.f32 %v1049, %v1014
  %v1051 = vmul.f32 %v1050, %v1049
  %v1052 = vmul.f32 0.5, %v1051
  %v1053 = vsub.f32 1.5, %v1052
  %v1054 = vmul.f32 %v1049, %v1053
  %vm1055 = vweird.f32 %v1014
  %vm1056 = vweird.f32 %v1049
  %vm1057 = vmor %vm1055, %vm1056
  %v1058 = vsel %vm1057, %v1049, %v1054
  %v1059 = vrsqrt.pop %v1015
  %v1060 = vmul.f32 %v1059, %v1015
  %v1061 = vmul.f32 %v1060, %v1059
  %v1062 = vmul.f32 0.5, %v1061
  %v1063 = vsub.f32 1.5, %v1062
  %v1064 = vmul.f32 %v1059, %v1063
  %vm1065 = vweird.f32 %v1015
  %vm1066 = vweird.f32 %v1059
  %vm1067 = vmor %vm1065, %vm1066
  %v1068 = vsel %vm1067, %v1059, %v1064
  %v1069 = vrsqrt.pop %v1016
  %v1070 = vmul.f32 %v1069, %v1016
  %v1071 = vmul.f32 %v1070, %v1069
  %v1072 = vmul.f32 0.5, %v1071
  %v1073 = vsub.f32 1.5, %v1072
  %v1074 = vmul.f32 %v1069, %v1073
  %vm1075 = vweird.f32 %v1016
  %vm1076 = vweird.f32 %v1069
  %vm1077 = vmor %vm1075, %vm1076
  %v1078 = vsel %vm1077, %v1069, %v1074
  %v1079 = vrsqrt.pop %v1017
  %v1080 = vmul.f32 %v1079, %v1017
  %v1081 = vmul.f32 %v1080, %v1079
  %v1082 = vmul.f32 0.5, %v1081
  %v1083 = vsub.f32 1.5, %v1082
  %v1084 = vmul.f32 %v1079, %v1083
  %vm1085 = vweird.f32 %v1017
  %vm1086 = vweird.f32 %v1079
  %vm1087 = vmor %vm1085, %vm1086
  %v1088 = vsel %vm1087, %v1079, %v1084
  %v1089 = vrsqrt.pop %v1018
  %v1090 = vmul.f32 %v1089, %v1018
  %v1091 = vmul.f32 %v1090, %v1089
  %v1092 = vmul.f32 0.5, %v1091
  %v1093 = vsub.f32 1.5, %v1092
  %v1094 = vmul.f32 %v1089, %v1093
  %vm1095 = vweird.f32 %v1018
  %vm1096 = vweird.f32 %v1089
  %vm1097 = vmor %vm1095, %vm1096
  %v1098 = vsel %vm1097, %v1089, %v1094
  %v1099 = vmul.f32 %v867, %v1028
  %v1100 = vmul.f32 %v868, %v1038
  %v1101 = vmul.f32 %v869, %v1048
  %v1102 = vmul.f32 %v870, %v1058
  %v1103 = vmul.f32 %v871, %v1068
  %v1104 = vmul.f32 %v872, %v1078
  %v1105 = vmul.f32 %v873, %v1088
  %v1106 = vmul.f32 %v874, %v1098
  %v1107 = vmul.f32 %v979, %v1028
  %v1108 = vmul.f32 %v980, %v1038
  %v1109 = vmul.f32 %v981, %v1048
  %v1110 = vmul.f32 %v982, %v1058
  %v1111 = vmul.f32 %v983, %v1068
  %v1112 = vmul.f32 %v984, %v1078
  %v1113 = vmul.f32 %v985, %v1088
  %v1114 = vmul.f32 %v986, %v1098
  %s1115 = scalar_lea.vmem %s42, 1536
  %v1116 = vld [vmem:[%s1115] sm:$0xff]
  %v1117 = vld [vmem:[%s1115 + $0x8] sm:$0xff]
  %v1118 = vld [vmem:[%s1115 + $0x10] sm:$0xff]
  %v1119 = vld [vmem:[%s1115 + $0x18] sm:$0xff]
  %v1120 = vld [vmem:[%s1115 + $0x20] sm:$0xff]
  %v1121 = vld [vmem:[%s1115 + $0x28] sm:$0xff]
  %v1122 = vld [vmem:[%s1115 + $0x30] sm:$0xff]
  %v1123 = vld [vmem:[%s1115 + $0x38] sm:$0xff]
  %s1124 = scalar_lea.vmem %s42, 768
  %v1125 = vld [vmem:[%s1124] sm:$0xff]
  %v1126 = vld [vmem:[%s1124 + $0x8] sm:$0xff]
  %v1127 = vld [vmem:[%s1124 + $0x10] sm:$0xff]
  %v1128 = vld [vmem:[%s1124 + $0x18] sm:$0xff]
  %v1129 = vld [vmem:[%s1124 + $0x20] sm:$0xff]
  %v1130 = vld [vmem:[%s1124 + $0x28] sm:$0xff]
  %v1131 = vld [vmem:[%s1124 + $0x30] sm:$0xff]
  %v1132 = vld [vmem:[%s1124 + $0x38] sm:$0xff]
  %v1133 = vmul.f32 %v1125, %v1107
  %v1134 = vmul.f32 %v1126, %v1108
  %v1135 = vmul.f32 %v1127, %v1109
  %v1136 = vmul.f32 %v1128, %v1110
  %v1137 = vmul.f32 %v1129, %v1111
  %v1138 = vmul.f32 %v1130, %v1112
  %v1139 = vmul.f32 %v1131, %v1113
  %v1140 = vmul.f32 %v1132, %v1114
  %v1141 = vadd.f32 %v1116, %v1133
  %v1142 = vadd.f32 %v1117, %v1134
  %v1143 = vadd.f32 %v1118, %v1135
  %v1144 = vadd.f32 %v1119, %v1136
  %v1145 = vadd.f32 %v1120, %v1137
  %v1146 = vadd.f32 %v1121, %v1138
  %v1147 = vadd.f32 %v1122, %v1139
  %v1148 = vadd.f32 %v1123, %v1140
  %s1149 = scalar_lea.vmem %s42, 1152
  %v1150 = vld [vmem:[%s1149] sm:$0xff]
  %v1151 = vld [vmem:[%s1149 + $0x8] sm:$0xff]
  %v1152 = vld [vmem:[%s1149 + $0x10] sm:$0xff]
  %v1153 = vld [vmem:[%s1149 + $0x18] sm:$0xff]
  %v1154 = vld [vmem:[%s1149 + $0x20] sm:$0xff]
  %v1155 = vld [vmem:[%s1149 + $0x28] sm:$0xff]
  %v1156 = vld [vmem:[%s1149 + $0x30] sm:$0xff]
  %v1157 = vld [vmem:[%s1149 + $0x38] sm:$0xff]
  %v1158 = vmul.f32 %v1150, %v1099
  %v1159 = vmul.f32 %v1151, %v1100
  %v1160 = vmul.f32 %v1152, %v1101
  %v1161 = vmul.f32 %v1153, %v1102
  %v1162 = vmul.f32 %v1154, %v1103
  %v1163 = vmul.f32 %v1155, %v1104
  %v1164 = vmul.f32 %v1156, %v1105
  %v1165 = vmul.f32 %v1157, %v1106
  %v1166 = vadd.f32 %v1141, %v1158
  %v1167 = vadd.f32 %v1142, %v1159
  %v1168 = vadd.f32 %v1143, %v1160
  %v1169 = vadd.f32 %v1144, %v1161
  %v1170 = vadd.f32 %v1145, %v1162
  %v1171 = vadd.f32 %v1146, %v1163
  %v1172 = vadd.f32 %v1147, %v1164
  %v1173 = vadd.f32 %v1148, %v1165
  %v1174 = vmul.f32 %v1107, %v1099
  %v1175 = vmul.f32 %v1108, %v1100
  %v1176 = vmul.f32 %v1109, %v1101
  %v1177 = vmul.f32 %v1110, %v1102
  %v1178 = vmul.f32 %v1111, %v1103
  %v1179 = vmul.f32 %v1112, %v1104
  %v1180 = vmul.f32 %v1113, %v1105
  %v1181 = vmul.f32 %v1114, %v1106
  %v1182 = vadd.f32 %v1174, %v1174
  %v1183 = vadd.f32 %v1175, %v1175
  %v1184 = vadd.f32 %v1176, %v1176
  %v1185 = vadd.f32 %v1177, %v1177
  %v1186 = vadd.f32 %v1178, %v1178
  %v1187 = vadd.f32 %v1179, %v1179
  %v1188 = vadd.f32 %v1180, %v1180
  %v1189 = vadd.f32 %v1181, %v1181
  %v1190 = vmul.f32 %v1099, %v1099
  %v1191 = vmul.f32 %v1100, %v1100
  %v1192 = vmul.f32 %v1101, %v1101
  %v1193 = vmul.f32 %v1102, %v1102
  %v1194 = vmul.f32 %v1103, %v1103
  %v1195 = vmul.f32 %v1104, %v1104
  %v1196 = vmul.f32 %v1105, %v1105
  %v1197 = vmul.f32 %v1106, %v1106
  %v1198 = vmul.f32 %v1107, %v1107
  %v1199 = vmul.f32 %v1108, %v1108
  %v1200 = vmul.f32 %v1109, %v1109
  %v1201 = vmul.f32 %v1110, %v1110
  %v1202 = vmul.f32 %v1111, %v1111
  %v1203 = vmul.f32 %v1112, %v1112
  %v1204 = vmul.f32 %v1113, %v1113
  %v1205 = vmul.f32 %v1114, %v1114
  %v1206 = vsub.f32 %v1190, %v1198
  %v1207 = vsub.f32 %v1191, %v1199
  %v1208 = vsub.f32 %v1192, %v1200
  %v1209 = vsub.f32 %v1193, %v1201
  %v1210 = vsub.f32 %v1194, %v1202
  %v1211 = vsub.f32 %v1195, %v1203
  %v1212 = vsub.f32 %v1196, %v1204
  %v1213 = vsub.f32 %v1197, %v1205
  %s1214 = scalar_lea.vmem %s42, 832
  %v1215 = vld [vmem:[%s1214] sm:$0xff]
  %v1216 = vld [vmem:[%s1214 + $0x8] sm:$0xff]
  %v1217 = vld [vmem:[%s1214 + $0x10] sm:$0xff]
  %v1218 = vld [vmem:[%s1214 + $0x18] sm:$0xff]
  %v1219 = vld [vmem:[%s1214 + $0x20] sm:$0xff]
  %v1220 = vld [vmem:[%s1214 + $0x28] sm:$0xff]
  %v1221 = vld [vmem:[%s1214 + $0x30] sm:$0xff]
  %v1222 = vld [vmem:[%s1214 + $0x38] sm:$0xff]
  %v1223 = vmul.f32 %v1215, %v1182
  %v1224 = vmul.f32 %v1216, %v1183
  %v1225 = vmul.f32 %v1217, %v1184
  %v1226 = vmul.f32 %v1218, %v1185
  %v1227 = vmul.f32 %v1219, %v1186
  %v1228 = vmul.f32 %v1220, %v1187
  %v1229 = vmul.f32 %v1221, %v1188
  %v1230 = vmul.f32 %v1222, %v1189
  %v1231 = vadd.f32 %v1166, %v1223
  %v1232 = vadd.f32 %v1167, %v1224
  %v1233 = vadd.f32 %v1168, %v1225
  %v1234 = vadd.f32 %v1169, %v1226
  %v1235 = vadd.f32 %v1170, %v1227
  %v1236 = vadd.f32 %v1171, %v1228
  %v1237 = vadd.f32 %v1172, %v1229
  %v1238 = vadd.f32 %v1173, %v1230
  %s1239 = scalar_lea.vmem %s42, 1216
  %v1240 = vld [vmem:[%s1239] sm:$0xff]
  %v1241 = vld [vmem:[%s1239 + $0x8] sm:$0xff]
  %v1242 = vld [vmem:[%s1239 + $0x10] sm:$0xff]
  %v1243 = vld [vmem:[%s1239 + $0x18] sm:$0xff]
  %v1244 = vld [vmem:[%s1239 + $0x20] sm:$0xff]
  %v1245 = vld [vmem:[%s1239 + $0x28] sm:$0xff]
  %v1246 = vld [vmem:[%s1239 + $0x30] sm:$0xff]
  %v1247 = vld [vmem:[%s1239 + $0x38] sm:$0xff]
  %v1248 = vmul.f32 %v1240, %v1206
  %v1249 = vmul.f32 %v1241, %v1207
  %v1250 = vmul.f32 %v1242, %v1208
  %v1251 = vmul.f32 %v1243, %v1209
  %v1252 = vmul.f32 %v1244, %v1210
  %v1253 = vmul.f32 %v1245, %v1211
  %v1254 = vmul.f32 %v1246, %v1212
  %v1255 = vmul.f32 %v1247, %v1213
  %v1256 = vadd.f32 %v1231, %v1248
  %v1257 = vadd.f32 %v1232, %v1249
  %v1258 = vadd.f32 %v1233, %v1250
  %v1259 = vadd.f32 %v1234, %v1251
  %v1260 = vadd.f32 %v1235, %v1252
  %v1261 = vadd.f32 %v1236, %v1253
  %v1262 = vadd.f32 %v1237, %v1254
  %v1263 = vadd.f32 %v1238, %v1255
  %v1264 = vmul.f32 %v1182, %v1099
  %v1265 = vmul.f32 %v1183, %v1100
  %v1266 = vmul.f32 %v1184, %v1101
  %v1267 = vmul.f32 %v1185, %v1102
  %v1268 = vmul.f32 %v1186, %v1103
  %v1269 = vmul.f32 %v1187, %v1104
  %v1270 = vmul.f32 %v1188, %v1105
  %v1271 = vmul.f32 %v1189, %v1106
  %v1272 = vmul.f32 %v1206, %v1107
  %v1273 = vmul.f32 %v1207, %v1108
  %v1274 = vmul.f32 %v1208, %v1109
  %v1275 = vmul.f32 %v1209, %v1110
  %v1276 = vmul.f32 %v1210, %v1111
  %v1277 = vmul.f32 %v1211, %v1112
  %v1278 = vmul.f32 %v1212, %v1113
  %v1279 = vmul.f32 %v1213, %v1114
  %v1280 = vadd.f32 %v1264, %v1272
  %v1281 = vadd.f32 %v1265, %v1273
  %v1282 = vadd.f32 %v1266, %v1274
  %v1283 = vadd.f32 %v1267, %v1275
  %v1284 = vadd.f32 %v1268, %v1276
  %v1285 = vadd.f32 %v1269, %v1277
  %v1286 = vadd.f32 %v1270, %v1278
  %v1287 = vadd.f32 %v1271, %v1279
  %v1288 = vmul.f32 %v1206, %v1099
  %v1289 = vmul.f32 %v1207, %v1100
  %v1290 = vmul.f32 %v1208, %v1101
  %v1291 = vmul.f32 %v1209, %v1102
  %v1292 = vmul.f32 %v1210, %v1103
  %v1293 = vmul.f32 %v1211, %v1104
  %v1294 = vmul.f32 %v1212, %v1105
  %v1295 = vmul.f32 %v1213, %v1106
  %v1296 = vmul.f32 %v1182, %v1107
  %v1297 = vmul.f32 %v1183, %v1108
  %v1298 = vmul.f32 %v1184, %v1109
  %v1299 = vmul.f32 %v1185, %v1110
  %v1300 = vmul.f32 %v1186, %v1111
  %v1301 = vmul.f32 %v1187, %v1112
  %v1302 = vmul.f32 %v1188, %v1113
  %v1303 = vmul.f32 %v1189, %v1114
  %v1304 = vsub.f32 %v1288, %v1296
  %v1305 = vsub.f32 %v1289, %v1297
  %v1306 = vsub.f32 %v1290, %v1298
  %v1307 = vsub.f32 %v1291, %v1299
  %v1308 = vsub.f32 %v1292, %v1300
  %v1309 = vsub.f32 %v1293, %v1301
  %v1310 = vsub.f32 %v1294, %v1302
  %v1311 = vsub.f32 %v1295, %v1303
  %s1312 = scalar_lea.vmem %s42, 896
  %v1313 = vld [vmem:[%s1312] sm:$0xff]
  %v1314 = vld [vmem:[%s1312 + $0x8] sm:$0xff]
  %v1315 = vld [vmem:[%s1312 + $0x10] sm:$0xff]
  %v1316 = vld [vmem:[%s1312 + $0x18] sm:$0xff]
  %v1317 = vld [vmem:[%s1312 + $0x20] sm:$0xff]
  %v1318 = vld [vmem:[%s1312 + $0x28] sm:$0xff]
  %v1319 = vld [vmem:[%s1312 + $0x30] sm:$0xff]
  %v1320 = vld [vmem:[%s1312 + $0x38] sm:$0xff]
  %v1321 = vmul.f32 %v1313, %v1280
  %v1322 = vmul.f32 %v1314, %v1281
  %v1323 = vmul.f32 %v1315, %v1282
  %v1324 = vmul.f32 %v1316, %v1283
  %v1325 = vmul.f32 %v1317, %v1284
  %v1326 = vmul.f32 %v1318, %v1285
  %v1327 = vmul.f32 %v1319, %v1286
  %v1328 = vmul.f32 %v1320, %v1287
  %v1329 = vadd.f32 %v1256, %v1321
  %v1330 = vadd.f32 %v1257, %v1322
  %v1331 = vadd.f32 %v1258, %v1323
  %v1332 = vadd.f32 %v1259, %v1324
  %v1333 = vadd.f32 %v1260, %v1325
  %v1334 = vadd.f32 %v1261, %v1326
  %v1335 = vadd.f32 %v1262, %v1327
  %v1336 = vadd.f32 %v1263, %v1328
  %s1337 = scalar_lea.vmem %s42, 1280
  %v1338 = vld [vmem:[%s1337] sm:$0xff]
  %v1339 = vld [vmem:[%s1337 + $0x8] sm:$0xff]
  %v1340 = vld [vmem:[%s1337 + $0x10] sm:$0xff]
  %v1341 = vld [vmem:[%s1337 + $0x18] sm:$0xff]
  %v1342 = vld [vmem:[%s1337 + $0x20] sm:$0xff]
  %v1343 = vld [vmem:[%s1337 + $0x28] sm:$0xff]
  %v1344 = vld [vmem:[%s1337 + $0x30] sm:$0xff]
  %v1345 = vld [vmem:[%s1337 + $0x38] sm:$0xff]
  %v1346 = vmul.f32 %v1338, %v1304
  %v1347 = vmul.f32 %v1339, %v1305
  %v1348 = vmul.f32 %v1340, %v1306
  %v1349 = vmul.f32 %v1341, %v1307
  %v1350 = vmul.f32 %v1342, %v1308
  %v1351 = vmul.f32 %v1343, %v1309
  %v1352 = vmul.f32 %v1344, %v1310
  %v1353 = vmul.f32 %v1345, %v1311
  %v1354 = vadd.f32 %v1329, %v1346
  %v1355 = vadd.f32 %v1330, %v1347
  %v1356 = vadd.f32 %v1331, %v1348
  %v1357 = vadd.f32 %v1332, %v1349
  %v1358 = vadd.f32 %v1333, %v1350
  %v1359 = vadd.f32 %v1334, %v1351
  %v1360 = vadd.f32 %v1335, %v1352
  %v1361 = vadd.f32 %v1336, %v1353
  %v1362 = vmul.f32 %v1280, %v1099
  %v1363 = vmul.f32 %v1281, %v1100
  %v1364 = vmul.f32 %v1282, %v1101
  %v1365 = vmul.f32 %v1283, %v1102
  %v1366 = vmul.f32 %v1284, %v1103
  %v1367 = vmul.f32 %v1285, %v1104
  %v1368 = vmul.f32 %v1286, %v1105
  %v1369 = vmul.f32 %v1287, %v1106
  %v1370 = vmul.f32 %v1304, %v1107
  %v1371 = vmul.f32 %v1305, %v1108
  %v1372 = vmul.f32 %v1306, %v1109
  %v1373 = vmul.f32 %v1307, %v1110
  %v1374 = vmul.f32 %v1308, %v1111
  %v1375 = vmul.f32 %v1309, %v1112
  %v1376 = vmul.f32 %v1310, %v1113
  %v1377 = vmul.f32 %v1311, %v1114
  %v1378 = vadd.f32 %v1362, %v1370
  %v1379 = vadd.f32 %v1363, %v1371
  %v1380 = vadd.f32 %v1364, %v1372
  %v1381 = vadd.f32 %v1365, %v1373
  %v1382 = vadd.f32 %v1366, %v1374
  %v1383 = vadd.f32 %v1367, %v1375
  %v1384 = vadd.f32 %v1368, %v1376
  %v1385 = vadd.f32 %v1369, %v1377
  %v1386 = vmul.f32 %v1304, %v1099
  %v1387 = vmul.f32 %v1305, %v1100
  %v1388 = vmul.f32 %v1306, %v1101
  %v1389 = vmul.f32 %v1307, %v1102
  %v1390 = vmul.f32 %v1308, %v1103
  %v1391 = vmul.f32 %v1309, %v1104
  %v1392 = vmul.f32 %v1310, %v1105
  %v1393 = vmul.f32 %v1311, %v1106
  %v1394 = vmul.f32 %v1280, %v1107
  %v1395 = vmul.f32 %v1281, %v1108
  %v1396 = vmul.f32 %v1282, %v1109
  %v1397 = vmul.f32 %v1283, %v1110
  %v1398 = vmul.f32 %v1284, %v1111
  %v1399 = vmul.f32 %v1285, %v1112
  %v1400 = vmul.f32 %v1286, %v1113
  %v1401 = vmul.f32 %v1287, %v1114
  %v1402 = vsub.f32 %v1386, %v1394
  %v1403 = vsub.f32 %v1387, %v1395
  %v1404 = vsub.f32 %v1388, %v1396
  %v1405 = vsub.f32 %v1389, %v1397
  %v1406 = vsub.f32 %v1390, %v1398
  %v1407 = vsub.f32 %v1391, %v1399
  %v1408 = vsub.f32 %v1392, %v1400
  %v1409 = vsub.f32 %v1393, %v1401
  %s1410 = scalar_lea.vmem %s42, 960
  %v1411 = vld [vmem:[%s1410] sm:$0xff]
  %v1412 = vld [vmem:[%s1410 + $0x8] sm:$0xff]
  %v1413 = vld [vmem:[%s1410 + $0x10] sm:$0xff]
  %v1414 = vld [vmem:[%s1410 + $0x18] sm:$0xff]
  %v1415 = vld [vmem:[%s1410 + $0x20] sm:$0xff]
  %v1416 = vld [vmem:[%s1410 + $0x28] sm:$0xff]
  %v1417 = vld [vmem:[%s1410 + $0x30] sm:$0xff]
  %v1418 = vld [vmem:[%s1410 + $0x38] sm:$0xff]
  %v1419 = vmul.f32 %v1411, %v1378
  %v1420 = vmul.f32 %v1412, %v1379
  %v1421 = vmul.f32 %v1413, %v1380
  %v1422 = vmul.f32 %v1414, %v1381
  %v1423 = vmul.f32 %v1415, %v1382
  %v1424 = vmul.f32 %v1416, %v1383
  %v1425 = vmul.f32 %v1417, %v1384
  %v1426 = vmul.f32 %v1418, %v1385
  %v1427 = vadd.f32 %v1354, %v1419
  %v1428 = vadd.f32 %v1355, %v1420
  %v1429 = vadd.f32 %v1356, %v1421
  %v1430 = vadd.f32 %v1357, %v1422
  %v1431 = vadd.f32 %v1358, %v1423
  %v1432 = vadd.f32 %v1359, %v1424
  %v1433 = vadd.f32 %v1360, %v1425
  %v1434 = vadd.f32 %v1361, %v1426
  %s1435 = scalar_lea.vmem %s42, 1344
  %v1436 = vld [vmem:[%s1435] sm:$0xff]
  %v1437 = vld [vmem:[%s1435 + $0x8] sm:$0xff]
  %v1438 = vld [vmem:[%s1435 + $0x10] sm:$0xff]
  %v1439 = vld [vmem:[%s1435 + $0x18] sm:$0xff]
  %v1440 = vld [vmem:[%s1435 + $0x20] sm:$0xff]
  %v1441 = vld [vmem:[%s1435 + $0x28] sm:$0xff]
  %v1442 = vld [vmem:[%s1435 + $0x30] sm:$0xff]
  %v1443 = vld [vmem:[%s1435 + $0x38] sm:$0xff]
  %v1444 = vmul.f32 %v1436, %v1402
  %v1445 = vmul.f32 %v1437, %v1403
  %v1446 = vmul.f32 %v1438, %v1404
  %v1447 = vmul.f32 %v1439, %v1405
  %v1448 = vmul.f32 %v1440, %v1406
  %v1449 = vmul.f32 %v1441, %v1407
  %v1450 = vmul.f32 %v1442, %v1408
  %v1451 = vmul.f32 %v1443, %v1409
  %v1452 = vadd.f32 %v1427, %v1444
  %v1453 = vadd.f32 %v1428, %v1445
  %v1454 = vadd.f32 %v1429, %v1446
  %v1455 = vadd.f32 %v1430, %v1447
  %v1456 = vadd.f32 %v1431, %v1448
  %v1457 = vadd.f32 %v1432, %v1449
  %v1458 = vadd.f32 %v1433, %v1450
  %v1459 = vadd.f32 %v1434, %v1451
  %v1460 = vmul.f32 %v1378, %v1099
  %v1461 = vmul.f32 %v1379, %v1100
  %v1462 = vmul.f32 %v1380, %v1101
  %v1463 = vmul.f32 %v1381, %v1102
  %v1464 = vmul.f32 %v1382, %v1103
  %v1465 = vmul.f32 %v1383, %v1104
  %v1466 = vmul.f32 %v1384, %v1105
  %v1467 = vmul.f32 %v1385, %v1106
  %v1468 = vmul.f32 %v1402, %v1107
  %v1469 = vmul.f32 %v1403, %v1108
  %v1470 = vmul.f32 %v1404, %v1109
  %v1471 = vmul.f32 %v1405, %v1110
  %v1472 = vmul.f32 %v1406, %v1111
  %v1473 = vmul.f32 %v1407, %v1112
  %v1474 = vmul.f32 %v1408, %v1113
  %v1475 = vmul.f32 %v1409, %v1114
  %v1476 = vadd.f32 %v1460, %v1468
  %v1477 = vadd.f32 %v1461, %v1469
  %v1478 = vadd.f32 %v1462, %v1470
  %v1479 = vadd.f32 %v1463, %v1471
  %v1480 = vadd.f32 %v1464, %v1472
  %v1481 = vadd.f32 %v1465, %v1473
  %v1482 = vadd.f32 %v1466, %v1474
  %v1483 = vadd.f32 %v1467, %v1475
  %v1484 = vmul.f32 %v1402, %v1099
  %v1485 = vmul.f32 %v1403, %v1100
  %v1486 = vmul.f32 %v1404, %v1101
  %v1487 = vmul.f32 %v1405, %v1102
  %v1488 = vmul.f32 %v1406, %v1103
  %v1489 = vmul.f32 %v1407, %v1104
  %v1490 = vmul.f32 %v1408, %v1105
  %v1491 = vmul.f32 %v1409, %v1106
  %v1492 = vmul.f32 %v1378, %v1107
  %v1493 = vmul.f32 %v1379, %v1108
  %v1494 = vmul.f32 %v1380, %v1109
  %v1495 = vmul.f32 %v1381, %v1110
  %v1496 = vmul.f32 %v1382, %v1111
  %v1497 = vmul.f32 %v1383, %v1112
  %v1498 = vmul.f32 %v1384, %v1113
  %v1499 = vmul.f32 %v1385, %v1114
  %v1500 = vsub.f32 %v1484, %v1492
  %v1501 = vsub.f32 %v1485, %v1493
  %v1502 = vsub.f32 %v1486, %v1494
  %v1503 = vsub.f32 %v1487, %v1495
  %v1504 = vsub.f32 %v1488, %v1496
  %v1505 = vsub.f32 %v1489, %v1497
  %v1506 = vsub.f32 %v1490, %v1498
  %v1507 = vsub.f32 %v1491, %v1499
  %s1508 = scalar_lea.vmem %s42, 1024
  %v1509 = vld [vmem:[%s1508] sm:$0xff]
  %v1510 = vld [vmem:[%s1508 + $0x8] sm:$0xff]
  %v1511 = vld [vmem:[%s1508 + $0x10] sm:$0xff]
  %v1512 = vld [vmem:[%s1508 + $0x18] sm:$0xff]
  %v1513 = vld [vmem:[%s1508 + $0x20] sm:$0xff]
  %v1514 = vld [vmem:[%s1508 + $0x28] sm:$0xff]
  %v1515 = vld [vmem:[%s1508 + $0x30] sm:$0xff]
  %v1516 = vld [vmem:[%s1508 + $0x38] sm:$0xff]
  %v1517 = vmul.f32 %v1509, %v1476
  %v1518 = vmul.f32 %v1510, %v1477
  %v1519 = vmul.f32 %v1511, %v1478
  %v1520 = vmul.f32 %v1512, %v1479
  %v1521 = vmul.f32 %v1513, %v1480
  %v1522 = vmul.f32 %v1514, %v1481
  %v1523 = vmul.f32 %v1515, %v1482
  %v1524 = vmul.f32 %v1516, %v1483
  %v1525 = vadd.f32 %v1452, %v1517
  %v1526 = vadd.f32 %v1453, %v1518
  %v1527 = vadd.f32 %v1454, %v1519
  %v1528 = vadd.f32 %v1455, %v1520
  %v1529 = vadd.f32 %v1456, %v1521
  %v1530 = vadd.f32 %v1457, %v1522
  %v1531 = vadd.f32 %v1458, %v1523
  %v1532 = vadd.f32 %v1459, %v1524
  %s1533 = scalar_lea.vmem %s42, 1408
  %v1534 = vld [vmem:[%s1533] sm:$0xff]
  %v1535 = vld [vmem:[%s1533 + $0x8] sm:$0xff]
  %v1536 = vld [vmem:[%s1533 + $0x10] sm:$0xff]
  %v1537 = vld [vmem:[%s1533 + $0x18] sm:$0xff]
  %v1538 = vld [vmem:[%s1533 + $0x20] sm:$0xff]
  %v1539 = vld [vmem:[%s1533 + $0x28] sm:$0xff]
  %v1540 = vld [vmem:[%s1533 + $0x30] sm:$0xff]
  %v1541 = vld [vmem:[%s1533 + $0x38] sm:$0xff]
  %v1542 = vmul.f32 %v1534, %v1500
  %v1543 = vmul.f32 %v1535, %v1501
  %v1544 = vmul.f32 %v1536, %v1502
  %v1545 = vmul.f32 %v1537, %v1503
  %v1546 = vmul.f32 %v1538, %v1504
  %v1547 = vmul.f32 %v1539, %v1505
  %v1548 = vmul.f32 %v1540, %v1506
  %v1549 = vmul.f32 %v1541, %v1507
  %v1550 = vadd.f32 %v1525, %v1542
  %v1551 = vadd.f32 %v1526, %v1543
  %v1552 = vadd.f32 %v1527, %v1544
  %v1553 = vadd.f32 %v1528, %v1545
  %v1554 = vadd.f32 %v1529, %v1546
  %v1555 = vadd.f32 %v1530, %v1547
  %v1556 = vadd.f32 %v1531, %v1548
  %v1557 = vadd.f32 %v1532, %v1549
  %v1558 = vmul.f32 %v1476, %v1099
  %v1559 = vmul.f32 %v1477, %v1100
  %v1560 = vmul.f32 %v1478, %v1101
  %v1561 = vmul.f32 %v1479, %v1102
  %v1562 = vmul.f32 %v1480, %v1103
  %v1563 = vmul.f32 %v1481, %v1104
  %v1564 = vmul.f32 %v1482, %v1105
  %v1565 = vmul.f32 %v1483, %v1106
  %v1566 = vmul.f32 %v1500, %v1107
  %v1567 = vmul.f32 %v1501, %v1108
  %v1568 = vmul.f32 %v1502, %v1109
  %v1569 = vmul.f32 %v1503, %v1110
  %v1570 = vmul.f32 %v1504, %v1111
  %v1571 = vmul.f32 %v1505, %v1112
  %v1572 = vmul.f32 %v1506, %v1113
  %v1573 = vmul.f32 %v1507, %v1114
  %v1574 = vadd.f32 %v1558, %v1566
  %v1575 = vadd.f32 %v1559, %v1567
  %v1576 = vadd.f32 %v1560, %v1568
  %v1577 = vadd.f32 %v1561, %v1569
  %v1578 = vadd.f32 %v1562, %v1570
  %v1579 = vadd.f32 %v1563, %v1571
  %v1580 = vadd.f32 %v1564, %v1572
  %v1581 = vadd.f32 %v1565, %v1573
  %v1582 = vmul.f32 %v1500, %v1099
  %v1583 = vmul.f32 %v1501, %v1100
  %v1584 = vmul.f32 %v1502, %v1101
  %v1585 = vmul.f32 %v1503, %v1102
  %v1586 = vmul.f32 %v1504, %v1103
  %v1587 = vmul.f32 %v1505, %v1104
  %v1588 = vmul.f32 %v1506, %v1105
  %v1589 = vmul.f32 %v1507, %v1106
  %v1590 = vmul.f32 %v1476, %v1107
  %v1591 = vmul.f32 %v1477, %v1108
  %v1592 = vmul.f32 %v1478, %v1109
  %v1593 = vmul.f32 %v1479, %v1110
  %v1594 = vmul.f32 %v1480, %v1111
  %v1595 = vmul.f32 %v1481, %v1112
  %v1596 = vmul.f32 %v1482, %v1113
  %v1597 = vmul.f32 %v1483, %v1114
  %v1598 = vsub.f32 %v1582, %v1590
  %v1599 = vsub.f32 %v1583, %v1591
  %v1600 = vsub.f32 %v1584, %v1592
  %v1601 = vsub.f32 %v1585, %v1593
  %v1602 = vsub.f32 %v1586, %v1594
  %v1603 = vsub.f32 %v1587, %v1595
  %v1604 = vsub.f32 %v1588, %v1596
  %v1605 = vsub.f32 %v1589, %v1597
  %s1606 = scalar_lea.vmem %s42, 1088
  %v1607 = vld [vmem:[%s1606] sm:$0xff]
  %v1608 = vld [vmem:[%s1606 + $0x8] sm:$0xff]
  %v1609 = vld [vmem:[%s1606 + $0x10] sm:$0xff]
  %v1610 = vld [vmem:[%s1606 + $0x18] sm:$0xff]
  %v1611 = vld [vmem:[%s1606 + $0x20] sm:$0xff]
  %v1612 = vld [vmem:[%s1606 + $0x28] sm:$0xff]
  %v1613 = vld [vmem:[%s1606 + $0x30] sm:$0xff]
  %v1614 = vld [vmem:[%s1606 + $0x38] sm:$0xff]
  %v1615 = vmul.f32 %v1607, %v1574
  %v1616 = vmul.f32 %v1608, %v1575
  %v1617 = vmul.f32 %v1609, %v1576
  %v1618 = vmul.f32 %v1610, %v1577
  %v1619 = vmul.f32 %v1611, %v1578
  %v1620 = vmul.f32 %v1612, %v1579
  %v1621 = vmul.f32 %v1613, %v1580
  %v1622 = vmul.f32 %v1614, %v1581
  %v1623 = vadd.f32 %v1550, %v1615
  %v1624 = vadd.f32 %v1551, %v1616
  %v1625 = vadd.f32 %v1552, %v1617
  %v1626 = vadd.f32 %v1553, %v1618
  %v1627 = vadd.f32 %v1554, %v1619
  %v1628 = vadd.f32 %v1555, %v1620
  %v1629 = vadd.f32 %v1556, %v1621
  %v1630 = vadd.f32 %v1557, %v1622
  %s1631 = scalar_lea.vmem %s42, 1472
  %v1632 = vld [vmem:[%s1631] sm:$0xff]
  %v1633 = vld [vmem:[%s1631 + $0x8] sm:$0xff]
  %v1634 = vld [vmem:[%s1631 + $0x10] sm:$0xff]
  %v1635 = vld [vmem:[%s1631 + $0x18] sm:$0xff]
  %v1636 = vld [vmem:[%s1631 + $0x20] sm:$0xff]
  %v1637 = vld [vmem:[%s1631 + $0x28] sm:$0xff]
  %v1638 = vld [vmem:[%s1631 + $0x30] sm:$0xff]
  %v1639 = vld [vmem:[%s1631 + $0x38] sm:$0xff]
  %v1640 = vmul.f32 %v1632, %v1598
  %v1641 = vmul.f32 %v1633, %v1599
  %v1642 = vmul.f32 %v1634, %v1600
  %v1643 = vmul.f32 %v1635, %v1601
  %v1644 = vmul.f32 %v1636, %v1602
  %v1645 = vmul.f32 %v1637, %v1603
  %v1646 = vmul.f32 %v1638, %v1604
  %v1647 = vmul.f32 %v1639, %v1605
  %v1648 = vadd.f32 %v1623, %v1640
  %v1649 = vadd.f32 %v1624, %v1641
  %v1650 = vadd.f32 %v1625, %v1642
  %v1651 = vadd.f32 %v1626, %v1643
  %v1652 = vadd.f32 %v1627, %v1644
  %v1653 = vadd.f32 %v1628, %v1645
  %v1654 = vadd.f32 %v1629, %v1646
  %v1655 = vadd.f32 %v1630, %v1647
  %v1656 = vld [vmem:[%s49] sm:$0xff]
  %v1657 = vld [vmem:[%s49 + $0x8] sm:$0xff]
  %v1658 = vld [vmem:[%s49 + $0x10] sm:$0xff]
  %v1659 = vld [vmem:[%s49 + $0x18] sm:$0xff]
  %v1660 = vld [vmem:[%s49 + $0x20] sm:$0xff]
  %v1661 = vld [vmem:[%s49 + $0x28] sm:$0xff]
  %v1662 = vld [vmem:[%s49 + $0x30] sm:$0xff]
  %v1663 = vld [vmem:[%s49 + $0x38] sm:$0xff]
  %vm1664 = vcmp.eq.s32.totalorder %v1656, 0
  %vm1665 = vcmp.eq.s32.totalorder %v1657, 0
  %vm1666 = vcmp.eq.s32.totalorder %v1658, 0
  %vm1667 = vcmp.eq.s32.totalorder %v1659, 0
  %vm1668 = vcmp.eq.s32.totalorder %v1660, 0
  %vm1669 = vcmp.eq.s32.totalorder %v1661, 0
  %vm1670 = vcmp.eq.s32.totalorder %v1662, 0
  %vm1671 = vcmp.eq.s32.totalorder %v1663, 0
  %v1672 = vsel %vm1664, %v1648, 0.0
  %v1673 = vsel %vm1665, %v1649, 0.0
  %v1674 = vsel %vm1666, %v1650, 0.0
  %v1675 = vsel %vm1667, %v1651, 0.0
  %v1676 = vsel %vm1668, %v1652, 0.0
  %v1677 = vsel %vm1669, %v1653, 0.0
  %v1678 = vsel %vm1670, %v1654, 0.0
  %v1679 = vsel %vm1671, %v1655, 0.0
  %v1680 = vld [vmem:[%s2] sm:$0x1]
  %v1681 = vadd.f32 %v1672, %v1673
  %v1682 = vadd.f32 %v1681, %v1674
  %v1683 = vadd.f32 %v1682, %v1675
  %v1684 = vadd.f32 %v1683, %v1676
  %v1685 = vadd.f32 %v1684, %v1677
  %v1686 = vadd.f32 %v1685, %v1678
  %v1687 = vadd.f32 %v1686, %v1679
  %v1688 = vrot.slane %v1687, 4
  %v1689 = vadd.f32 %v1687, %v1688
  %v1690 = vrot.slane %v1689, 2
  %v1691 = vadd.f32 %v1689, %v1690
  %v1692 = vrot.slane %v1691, 1
  %v1693 = vadd.f32 %v1691, %v1692
  %v1694 = vadd.f32 %v1680, %v1693
  %1695 = vst [vmem:[%s2] sm:$0x1] %v1694
  %vm1696 = vcmp.eq.s32.totalorder %v1656, 1
  %vm1697 = vcmp.eq.s32.totalorder %v1657, 1
  %vm1698 = vcmp.eq.s32.totalorder %v1658, 1
  %vm1699 = vcmp.eq.s32.totalorder %v1659, 1
  %vm1700 = vcmp.eq.s32.totalorder %v1660, 1
  %vm1701 = vcmp.eq.s32.totalorder %v1661, 1
  %vm1702 = vcmp.eq.s32.totalorder %v1662, 1
  %vm1703 = vcmp.eq.s32.totalorder %v1663, 1
  %v1704 = vsel %vm1696, %v1648, 0.0
  %v1705 = vsel %vm1697, %v1649, 0.0
  %v1706 = vsel %vm1698, %v1650, 0.0
  %v1707 = vsel %vm1699, %v1651, 0.0
  %v1708 = vsel %vm1700, %v1652, 0.0
  %v1709 = vsel %vm1701, %v1653, 0.0
  %v1710 = vsel %vm1702, %v1654, 0.0
  %v1711 = vsel %vm1703, %v1655, 0.0
  %v1712 = vld [vmem:[%s2 + $0x1] sm:$0x1]
  %v1713 = vadd.f32 %v1704, %v1705
  %v1714 = vadd.f32 %v1713, %v1706
  %v1715 = vadd.f32 %v1714, %v1707
  %v1716 = vadd.f32 %v1715, %v1708
  %v1717 = vadd.f32 %v1716, %v1709
  %v1718 = vadd.f32 %v1717, %v1710
  %v1719 = vadd.f32 %v1718, %v1711
  %v1720 = vrot.slane %v1719, 4
  %v1721 = vadd.f32 %v1719, %v1720
  %v1722 = vrot.slane %v1721, 2
  %v1723 = vadd.f32 %v1721, %v1722
  %v1724 = vrot.slane %v1723, 1
  %v1725 = vadd.f32 %v1723, %v1724
  %v1726 = vadd.f32 %v1712, %v1725
  %1727 = vst [vmem:[%s2 + $0x1] sm:$0x1] %v1726
  // Predicated region
  $region14: #{dihedral_energy.1} parent=0 // pred_check
    _
  $region15: #{dihedral_energy.1} parent=0 // pred_check_branch
    %1729 = sbr.rel (0) target = $region17
  $region16: #{dihedral_energy.1} parent=0 // pred_region
    _
  $region17: #{dihedral_energy.1} parent=0 // pred_fallthru
    _
  // Predicated region
  $region18: #{dihedral_energy.1} parent=0 // pred_check
    _
  $region19: #{dihedral_energy.1} parent=0 // pred_check_branch
    %1731 = sbr.rel (0) target = $region21
  $region20: #{dihedral_energy.1} parent=0 // pred_region
    _
  $region21: #{dihedral_energy.1} parent=0 // pred_fallthru
    _

</llo_original>
